<compile_context>
chip_gen: v7x
topology: tpu7x:2x2x1
jax: 0.10.0
libtpu: 0.0.40
codegen_flags: <defaults>
</compile_context>

<pallas_src>
import functools
import numpy as np
import jax
import jax.numpy as jnp
from jax.experimental import pallas as pl
from jax.experimental.pallas import tpu as pltpu


def _round_up(x, m):
    return ((x + m - 1) // m) * m


def gckb_kernel(h_ref, r_ref, t_ref, wseq_ref, bseq_ref, whr_ref, bhr_ref,
                wrt_ref, brt_ref, fcw_ref, fcb_ref, out_ref, *, rc):
    """Fused GCKB forward for one batch tile.

    h_ref/r_ref/t_ref : (Bt, D) VMEM   head / relation / tail embeddings
    wseq_ref          : (OC*3,) SMEM   conv_seq weights (kernel (1,3), in_ch=1)
    bseq_ref          : (OC,)   SMEM
    whr_ref           : (OC*2,) SMEM   conv_hr_a weights (kernel (1,2))
    bhr_ref           : (OC,)   SMEM
    wrt_ref           : (OC*2,) SMEM   conv_rt_a weights
    brt_ref           : (OC,)   SMEM
    fcw_ref           : (OC, D) VMEM   fc weight reshaped from (1, OC*D)
    fcb_ref           : (1,)    SMEM
    out_ref           : (Bt, 1) VMEM
    rc                : static row-chunk size (multiple of 8, divides Bt)
    """
    bt, d = h_ref.shape
    oc_total = fcw_ref.shape[0]
    n_chunks = bt // rc

    # Loop-invariant loads, hoisted out of the row-chunk loop.
    fcw_rows = [fcw_ref[oc, :][None, :] for oc in range(oc_total)]        # (1, D)
    wseq = [[wseq_ref[3 * oc + s] for s in range(3)] for oc in range(oc_total)]
    whr = [[whr_ref[2 * oc + s] for s in range(2)] for oc in range(oc_total)]
    wrt = [[wrt_ref[2 * oc + s] for s in range(2)] for oc in range(oc_total)]
    bseq = [bseq_ref[oc] for oc in range(oc_total)]
    bhr = [bhr_ref[oc] for oc in range(oc_total)]
    brt = [brt_ref[oc] for oc in range(oc_total)]
    fcb = fcb_ref[0]

    # Process the batch tile in rc-row chunks to bound vreg pressure
    # (all (rc, D) temporaries stay well inside the 64-vreg file).
    @pl.loop(0, n_chunks)
    def _(c):
        row0 = pl.multiple_of(c * rc, rc)
        h = h_ref[pl.ds(row0, rc), :]                                     # (rc, D)
        r = r_ref[pl.ds(row0, rc), :]
        t = t_ref[pl.ds(row0, rc), :]

        acc_d = jnp.zeros((rc, d), jnp.float32)
        # out_channels is small & static -> unrolled Python loop (VPU/EUP only).
        for oc in range(oc_total):
            # conv_seq: per-dim linear combo of (h, r, t)
            seq = (wseq[oc][0] * h + wseq[oc][1] * r + wseq[oc][2] * t
                   + bseq[oc])
            # conv_hr_a over (h, r) and conv_rt_a over (r, t)
            hr = whr[oc][0] * h + whr[oc][1] * r + bhr[oc]
            rt = wrt[oc][0] * r + wrt[oc][1] * t + brt[oc]
            a = jax.nn.sigmoid(hr * rt)
            # dropout is inference-mode identity here
            z = jnp.maximum(seq, 0.0) * a                 # ReLU(conv_out) * conv_a
            # fc contribution of this channel, kept as a VPU FMA; the lane
            # reduction is done once after the loop (1 XLU reduce per chunk).
            acc_d = acc_d + z * fcw_rows[oc]

        out_ref[pl.ds(row0, rc), :] = (
            jnp.sum(acc_d, axis=-1, keepdims=True) + fcb)


def conv_forward(batch_inputs, params, *, bt=1024, rc=64):
    """Full Conv.forward: embedding gather (glue) + fused GCKB Pallas kernel."""
    # TODO(synk): fuse the embedding gather into the kernel (scalar-prefetch of
    # batch_inputs + per-row DMA from ent/rel) to remove this HBM materialization.
    ent, rel = params["ent"], params["rel"]
    h = jnp.take(ent, batch_inputs[:, 0], axis=0).astype(jnp.float32)     # (B, D)
    r = jnp.take(rel, batch_inputs[:, 1], axis=0).astype(jnp.float32)
    t = jnp.take(ent, batch_inputs[:, 2], axis=0).astype(jnp.float32)

    b, d = h.shape
    oc_total = params["fcw"].shape[0]

    # Tile bookkeeping: rc multiple of 8, bt multiple of rc, tile clamped to
    # the (rc-rounded) batch so tiny batches don't allocate a huge block.
    rc = max(8, (rc // 8) * 8)
    bt = max(rc, (bt // rc) * rc)
    bt_eff = min(bt, _round_up(b, rc))

    smem = pl.BlockSpec(memory_space=pltpu.MemorySpace.SMEM)
    f32 = jnp.float32
    kernel = functools.partial(gckb_kernel, rc=rc)

    return pl.pallas_call(
        kernel,
        out_shape=jax.ShapeDtypeStruct((b, 1), jnp.float32),
        grid=(pl.cdiv(b, bt_eff),),
        in_specs=[
            pl.BlockSpec((bt_eff, d), lambda i: (i, 0)),      # h
            pl.BlockSpec((bt_eff, d), lambda i: (i, 0)),      # r
            pl.BlockSpec((bt_eff, d), lambda i: (i, 0)),      # t
            smem,                                             # wseq (OC*3,)
            smem,                                             # bseq (OC,)
            smem,                                             # whr  (OC*2,)
            smem,                                             # bhr  (OC,)
            smem,                                             # wrt  (OC*2,)
            smem,                                             # brt  (OC,)
            pl.BlockSpec((oc_total, d), lambda i: (0, 0)),    # fcw  (OC, D)
            smem,                                             # fcb  (1,)
        ],
        out_specs=pl.BlockSpec((bt_eff, 1), lambda i: (i, 0)),
        compiler_params=pltpu.CompilerParams(
            dimension_semantics=("parallel",)),
    )(h, r, t,
      params["wseq"].reshape(-1).astype(f32),
      params["bseq"].astype(f32),
      params["whr"].reshape(-1).astype(f32),
      params["bhr"].astype(f32),
      params["wrt"].reshape(-1).astype(f32),
      params["brt"].astype(f32),
      params["fcw"].astype(f32),
      params["fcb"].astype(f32))


def ref_forward(batch_inputs, p):
    """Pure-JAX reference matching the PyTorch forward (eval mode)."""
    h = p["ent"][batch_inputs[:, 0]]
    r = p["rel"][batch_inputs[:, 1]]
    t = p["ent"][batch_inputs[:, 2]]
    x = jnp.stack([h, r, t], axis=1)                                   # (B, 3, D)
    seq = jnp.einsum("bsd,os->bod", x, p["wseq"]) + p["bseq"][None, :, None]
    hr = jnp.einsum("bsd,os->bod", x[:, :2], p["whr"]) + p["bhr"][None, :, None]
    rt = jnp.einsum("bsd,os->bod", x[:, 1:], p["wrt"]) + p["brt"][None, :, None]
    a = jax.nn.sigmoid(hr * rt)
    z = jnp.maximum(seq, 0.0) * a
    return jnp.einsum("bod,od->b", z, p["fcw"])[:, None] + p["fcb"]


def init_params(key, num_nodes, num_relations, emb_dim, out_channels):
    ks = jax.random.split(key, 9)
    f32 = jnp.float32
    return {
        "ent":  jax.random.normal(ks[0], (num_nodes, emb_dim), f32),
        "rel":  jax.random.normal(ks[1], (num_relations, emb_dim), f32),
        # Conv2d(1, OC, (1,3)) weight (OC,1,1,3) -> (OC,3); biases (OC,)
        "wseq": jax.random.normal(ks[2], (out_channels, 3), f32) * 0.1,
        "bseq": jax.random.normal(ks[3], (out_channels,), f32) * 0.1,
        "whr":  jax.random.normal(ks[4], (out_channels, 2), f32) * 0.1,
        "bhr":  jax.random.normal(ks[5], (out_channels,), f32) * 0.1,
        "wrt":  jax.random.normal(ks[6], (out_channels, 2), f32) * 0.1,
        "brt":  jax.random.normal(ks[7], (out_channels,), f32) * 0.1,
        # Linear(emb_dim*OC, 1): weight (1, OC*D) -> reshape (OC, D) matching
        # conv_out.squeeze(-1).view(B, -1) flatten order (oc-major, dim-minor).
        "fcw":  (jax.random.normal(ks[8], (1, out_channels * emb_dim), f32)
                 * 0.1).reshape(out_channels, emb_dim),
        "fcb":  jnp.zeros((1,), f32) + 0.05,
    }


if __name__ == "__main__":
    # Small deterministic example (D=128 so lanes are fully used; B=100
    # exercises the partial-tile / row-chunk paths).
    num_nodes, num_relations, emb_dim, out_channels = 50, 11, 128, 4
    batch = 100

    params = init_params(jax.random.PRNGKey(0), num_nodes, num_relations,
                         emb_dim, out_channels)

    kb = jax.random.PRNGKey(0)
    heads = jax.random.randint(jax.random.fold_in(kb, 0), (batch,), 0, num_nodes)
    rels = jax.random.randint(jax.random.fold_in(kb, 1), (batch,), 0, num_relations)
    tails = jax.random.randint(jax.random.fold_in(kb, 2), (batch,), 0, num_nodes)
    batch_inputs = jnp.stack([heads, rels, tails], axis=1)   # (B, 3) int32

    out = conv_forward(batch_inputs, params)
    out = jax.block_until_ready(out)

    ref = ref_forward(batch_inputs, params)
    np.testing.assert_allclose(np.asarray(out), np.asarray(ref),
                               rtol=1e-4, atol=1e-4)
    assert out.shape == (batch, 1)
    print("KERNEL_OK")
</pallas_src>

<mosaic_0001>
module attributes {stable_mosaic.version = 11 : i64} {
  func.func @gckb_kernel(%arg0: i32, %arg1: memref<128x128xf32, #tpu.memory_space<vmem>>, %arg2: memref<128x128xf32, #tpu.memory_space<vmem>>, %arg3: memref<128x128xf32, #tpu.memory_space<vmem>>, %arg4: memref<12xf32, #tpu.memory_space<smem>>, %arg5: memref<4xf32, #tpu.memory_space<smem>>, %arg6: memref<8xf32, #tpu.memory_space<smem>>, %arg7: memref<4xf32, #tpu.memory_space<smem>>, %arg8: memref<8xf32, #tpu.memory_space<smem>>, %arg9: memref<4xf32, #tpu.memory_space<smem>>, %arg10: memref<4x128xf32, #tpu.memory_space<vmem>>, %arg11: memref<1xf32, #tpu.memory_space<smem>>, %arg12: memref<128x1xf32, #tpu.memory_space<vmem>>) attributes {dimension_semantics = [#tpu.dimension_semantics<parallel>], iteration_bounds = array<i64: 1>, scalar_prefetch = 0 : i64, scratch_operands = 0 : i64, tpu.core_type = #tpu.core_type<tc>, window_params = [{transform_indices = @transform_0, window_bounds = array<i64: 128, 128>}, {transform_indices = @transform_1, window_bounds = array<i64: 128, 128>}, {transform_indices = @transform_2, window_bounds = array<i64: 128, 128>}, {transform_indices = @transform_3, window_bounds = array<i64: 12>}, {transform_indices = @transform_4, window_bounds = array<i64: 4>}, {transform_indices = @transform_5, window_bounds = array<i64: 8>}, {transform_indices = @transform_6, window_bounds = array<i64: 4>}, {transform_indices = @transform_7, window_bounds = array<i64: 8>}, {transform_indices = @transform_8, window_bounds = array<i64: 4>}, {pipeline_mode = #tpu.pipeline_mode<synchronous>, transform_indices = @transform_9, window_bounds = array<i64: 4, 128>}, {transform_indices = @transform_10, window_bounds = array<i64: 1>}, {transform_indices = @transform_11, window_bounds = array<i64: 128, 1>}]} {
    %c0 = arith.constant 0 : index
    %c0_0 = arith.constant 0 : index
    %0 = vector.load %arg10[%c0, %c0_0] : memref<4x128xf32, #tpu.memory_space<vmem>>, vector<1x128xf32>
    %1 = vector.shape_cast %0 : vector<1x128xf32> to vector<128xf32>
    %2 = vector.shape_cast %1 : vector<128xf32> to vector<1x128xf32>
    %c1 = arith.constant 1 : index
    %c0_1 = arith.constant 0 : index
    %3 = vector.load %arg10[%c1, %c0_1] : memref<4x128xf32, #tpu.memory_space<vmem>>, vector<1x128xf32>
    %4 = vector.shape_cast %3 : vector<1x128xf32> to vector<128xf32>
    %5 = vector.shape_cast %4 : vector<128xf32> to vector<1x128xf32>
    %c2 = arith.constant 2 : index
    %c0_2 = arith.constant 0 : index
    %6 = vector.load %arg10[%c2, %c0_2] : memref<4x128xf32, #tpu.memory_space<vmem>>, vector<1x128xf32>
    %7 = vector.shape_cast %6 : vector<1x128xf32> to vector<128xf32>
    %8 = vector.shape_cast %7 : vector<128xf32> to vector<1x128xf32>
    %c3 = arith.constant 3 : index
    %c0_3 = arith.constant 0 : index
    %9 = vector.load %arg10[%c3, %c0_3] : memref<4x128xf32, #tpu.memory_space<vmem>>, vector<1x128xf32>
    %10 = vector.shape_cast %9 : vector<1x128xf32> to vector<128xf32>
    %11 = vector.shape_cast %10 : vector<128xf32> to vector<1x128xf32>
    %c0_4 = arith.constant 0 : index
    %12 = memref.load %arg4[%c0_4] : memref<12xf32, #tpu.memory_space<smem>>
    %c1_5 = arith.constant 1 : index
    %13 = memref.load %arg4[%c1_5] : memref<12xf32, #tpu.memory_space<smem>>
    %c2_6 = arith.constant 2 : index
    %14 = memref.load %arg4[%c2_6] : memref<12xf32, #tpu.memory_space<smem>>
    %c3_7 = arith.constant 3 : index
    %15 = memref.load %arg4[%c3_7] : memref<12xf32, #tpu.memory_space<smem>>
    %c4 = arith.constant 4 : index
    %16 = memref.load %arg4[%c4] : memref<12xf32, #tpu.memory_space<smem>>
    %c5 = arith.constant 5 : index
    %17 = memref.load %arg4[%c5] : memref<12xf32, #tpu.memory_space<smem>>
    %c6 = arith.constant 6 : index
    %18 = memref.load %arg4[%c6] : memref<12xf32, #tpu.memory_space<smem>>
    %c7 = arith.constant 7 : index
    %19 = memref.load %arg4[%c7] : memref<12xf32, #tpu.memory_space<smem>>
    %c8 = arith.constant 8 : index
    %20 = memref.load %arg4[%c8] : memref<12xf32, #tpu.memory_space<smem>>
    %c9 = arith.constant 9 : index
    %21 = memref.load %arg4[%c9] : memref<12xf32, #tpu.memory_space<smem>>
    %c10 = arith.constant 10 : index
    %22 = memref.load %arg4[%c10] : memref<12xf32, #tpu.memory_space<smem>>
    %c11 = arith.constant 11 : index
    %23 = memref.load %arg4[%c11] : memref<12xf32, #tpu.memory_space<smem>>
    %c0_8 = arith.constant 0 : index
    %24 = memref.load %arg6[%c0_8] : memref<8xf32, #tpu.memory_space<smem>>
    %c1_9 = arith.constant 1 : index
    %25 = memref.load %arg6[%c1_9] : memref<8xf32, #tpu.memory_space<smem>>
    %c2_10 = arith.constant 2 : index
    %26 = memref.load %arg6[%c2_10] : memref<8xf32, #tpu.memory_space<smem>>
    %c3_11 = arith.constant 3 : index
    %27 = memref.load %arg6[%c3_11] : memref<8xf32, #tpu.memory_space<smem>>
    %c4_12 = arith.constant 4 : index
    %28 = memref.load %arg6[%c4_12] : memref<8xf32, #tpu.memory_space<smem>>
    %c5_13 = arith.constant 5 : index
    %29 = memref.load %arg6[%c5_13] : memref<8xf32, #tpu.memory_space<smem>>
    %c6_14 = arith.constant 6 : index
    %30 = memref.load %arg6[%c6_14] : memref<8xf32, #tpu.memory_space<smem>>
    %c7_15 = arith.constant 7 : index
    %31 = memref.load %arg6[%c7_15] : memref<8xf32, #tpu.memory_space<smem>>
    %c0_16 = arith.constant 0 : index
    %32 = memref.load %arg8[%c0_16] : memref<8xf32, #tpu.memory_space<smem>>
    %c1_17 = arith.constant 1 : index
    %33 = memref.load %arg8[%c1_17] : memref<8xf32, #tpu.memory_space<smem>>
    %c2_18 = arith.constant 2 : index
    %34 = memref.load %arg8[%c2_18] : memref<8xf32, #tpu.memory_space<smem>>
    %c3_19 = arith.constant 3 : index
    %35 = memref.load %arg8[%c3_19] : memref<8xf32, #tpu.memory_space<smem>>
    %c4_20 = arith.constant 4 : index
    %36 = memref.load %arg8[%c4_20] : memref<8xf32, #tpu.memory_space<smem>>
    %c5_21 = arith.constant 5 : index
    %37 = memref.load %arg8[%c5_21] : memref<8xf32, #tpu.memory_space<smem>>
    %c6_22 = arith.constant 6 : index
    %38 = memref.load %arg8[%c6_22] : memref<8xf32, #tpu.memory_space<smem>>
    %c7_23 = arith.constant 7 : index
    %39 = memref.load %arg8[%c7_23] : memref<8xf32, #tpu.memory_space<smem>>
    %c0_24 = arith.constant 0 : index
    %40 = memref.load %arg5[%c0_24] : memref<4xf32, #tpu.memory_space<smem>>
    %c1_25 = arith.constant 1 : index
    %41 = memref.load %arg5[%c1_25] : memref<4xf32, #tpu.memory_space<smem>>
    %c2_26 = arith.constant 2 : index
    %42 = memref.load %arg5[%c2_26] : memref<4xf32, #tpu.memory_space<smem>>
    %c3_27 = arith.constant 3 : index
    %43 = memref.load %arg5[%c3_27] : memref<4xf32, #tpu.memory_space<smem>>
    %c0_28 = arith.constant 0 : index
    %44 = memref.load %arg7[%c0_28] : memref<4xf32, #tpu.memory_space<smem>>
    %c1_29 = arith.constant 1 : index
    %45 = memref.load %arg7[%c1_29] : memref<4xf32, #tpu.memory_space<smem>>
    %c2_30 = arith.constant 2 : index
    %46 = memref.load %arg7[%c2_30] : memref<4xf32, #tpu.memory_space<smem>>
    %c3_31 = arith.constant 3 : index
    %47 = memref.load %arg7[%c3_31] : memref<4xf32, #tpu.memory_space<smem>>
    %c0_32 = arith.constant 0 : index
    %48 = memref.load %arg9[%c0_32] : memref<4xf32, #tpu.memory_space<smem>>
    %c1_33 = arith.constant 1 : index
    %49 = memref.load %arg9[%c1_33] : memref<4xf32, #tpu.memory_space<smem>>
    %c2_34 = arith.constant 2 : index
    %50 = memref.load %arg9[%c2_34] : memref<4xf32, #tpu.memory_space<smem>>
    %c3_35 = arith.constant 3 : index
    %51 = memref.load %arg9[%c3_35] : memref<4xf32, #tpu.memory_space<smem>>
    %c0_36 = arith.constant 0 : index
    %52 = memref.load %arg11[%c0_36] : memref<1xf32, #tpu.memory_space<smem>>
    %c0_i32 = arith.constant 0 : i32
    %c2_i32 = arith.constant 2 : i32
    %53 = arith.addi %c0_i32, %c2_i32 : i32
    %c1_i32 = arith.constant 1 : i32
    scf.for %arg13 = %c0_i32 to %53 step %c1_i32  : i32 {
      %c1_i32_38 = arith.constant 1 : i32
      %54 = arith.muli %arg13, %c1_i32_38 : i32
      %c0_i32_39 = arith.constant 0 : i32
      %55 = arith.addi %c0_i32_39, %54 : i32
      %c64_i32 = arith.constant 64 : i32
      %56 = arith.muli %55, %c64_i32 : i32
      %57 = tpu.assume_multiple %56, 64 : i32
      %58 = arith.index_cast %57 : i32 to index
      %c0_40 = arith.constant 0 : index
      %59 = vector.load %arg1[%58, %c0_40] : memref<128x128xf32, #tpu.memory_space<vmem>>, vector<64x128xf32>
      %60 = arith.index_cast %57 : i32 to index
      %c0_41 = arith.constant 0 : index
      %61 = vector.load %arg2[%60, %c0_41] : memref<128x128xf32, #tpu.memory_space<vmem>>, vector<64x128xf32>
      %62 = arith.index_cast %57 : i32 to index
      %c0_42 = arith.constant 0 : index
      %63 = vector.load %arg3[%62, %c0_42] : memref<128x128xf32, #tpu.memory_space<vmem>>, vector<64x128xf32>
      %cst = arith.constant 0.000000e+00 : f32
      %64 = vector.broadcast %cst : f32 to vector<64x128xf32>
      %65 = vector.broadcast %12 : f32 to vector<64x128xf32>
      %66 = arith.mulf %65, %59 : vector<64x128xf32>
      %67 = vector.broadcast %13 : f32 to vector<64x128xf32>
      %68 = arith.mulf %67, %61 : vector<64x128xf32>
      %69 = arith.addf %66, %68 : vector<64x128xf32>
      %70 = vector.broadcast %14 : f32 to vector<64x128xf32>
      %71 = arith.mulf %70, %63 : vector<64x128xf32>
      %72 = arith.addf %69, %71 : vector<64x128xf32>
      %73 = vector.broadcast %40 : f32 to vector<64x128xf32>
      %74 = arith.addf %72, %73 : vector<64x128xf32>
      %75 = vector.broadcast %24 : f32 to vector<64x128xf32>
      %76 = arith.mulf %75, %59 : vector<64x128xf32>
      %77 = vector.broadcast %25 : f32 to vector<64x128xf32>
      %78 = arith.mulf %77, %61 : vector<64x128xf32>
      %79 = arith.addf %76, %78 : vector<64x128xf32>
      %80 = vector.broadcast %44 : f32 to vector<64x128xf32>
      %81 = arith.addf %79, %80 : vector<64x128xf32>
      %82 = vector.broadcast %32 : f32 to vector<64x128xf32>
      %83 = arith.mulf %82, %61 : vector<64x128xf32>
      %84 = vector.broadcast %33 : f32 to vector<64x128xf32>
      %85 = arith.mulf %84, %63 : vector<64x128xf32>
      %86 = arith.addf %83, %85 : vector<64x128xf32>
      %87 = vector.broadcast %48 : f32 to vector<64x128xf32>
      %88 = arith.addf %86, %87 : vector<64x128xf32>
      %89 = arith.mulf %81, %88 : vector<64x128xf32>
      %90 = arith.negf %89 : vector<64x128xf32>
      %91 = math.exp %90 : vector<64x128xf32>
      %cst_43 = arith.constant 1.000000e+00 : f32
      %92 = vector.broadcast %cst_43 : f32 to vector<64x128xf32>
      %93 = arith.addf %92, %91 : vector<64x128xf32>
      %94 = arith.divf %92, %93 : vector<64x128xf32>
      %cst_44 = arith.constant 0.000000e+00 : f32
      %95 = vector.broadcast %cst_44 : f32 to vector<64x128xf32>
      %96 = arith.maximumf %74, %95 : vector<64x128xf32>
      %97 = arith.mulf %96, %94 : vector<64x128xf32>
      %98 = vector.broadcast %2 : vector<1x128xf32> to vector<64x128xf32>
      %99 = arith.mulf %97, %98 : vector<64x128xf32>
      %100 = arith.addf %64, %99 : vector<64x128xf32>
      %101 = vector.broadcast %15 : f32 to vector<64x128xf32>
      %102 = arith.mulf %101, %59 : vector<64x128xf32>
      %103 = vector.broadcast %16 : f32 to vector<64x128xf32>
      %104 = arith.mulf %103, %61 : vector<64x128xf32>
      %105 = arith.addf %102, %104 : vector<64x128xf32>
      %106 = vector.broadcast %17 : f32 to vector<64x128xf32>
      %107 = arith.mulf %106, %63 : vector<64x128xf32>
      %108 = arith.addf %105, %107 : vector<64x128xf32>
      %109 = vector.broadcast %41 : f32 to vector<64x128xf32>
      %110 = arith.addf %108, %109 : vector<64x128xf32>
      %111 = vector.broadcast %26 : f32 to vector<64x128xf32>
      %112 = arith.mulf %111, %59 : vector<64x128xf32>
      %113 = vector.broadcast %27 : f32 to vector<64x128xf32>
      %114 = arith.mulf %113, %61 : vector<64x128xf32>
      %115 = arith.addf %112, %114 : vector<64x128xf32>
      %116 = vector.broadcast %45 : f32 to vector<64x128xf32>
      %117 = arith.addf %115, %116 : vector<64x128xf32>
      %118 = vector.broadcast %34 : f32 to vector<64x128xf32>
      %119 = arith.mulf %118, %61 : vector<64x128xf32>
      %120 = vector.broadcast %35 : f32 to vector<64x128xf32>
      %121 = arith.mulf %120, %63 : vector<64x128xf32>
      %122 = arith.addf %119, %121 : vector<64x128xf32>
      %123 = vector.broadcast %49 : f32 to vector<64x128xf32>
      %124 = arith.addf %122, %123 : vector<64x128xf32>
      %125 = arith.mulf %117, %124 : vector<64x128xf32>
      %126 = arith.negf %125 : vector<64x128xf32>
      %127 = math.exp %126 : vector<64x128xf32>
      %cst_45 = arith.constant 1.000000e+00 : f32
      %128 = vector.broadcast %cst_45 : f32 to vector<64x128xf32>
      %129 = arith.addf %128, %127 : vector<64x128xf32>
      %130 = arith.divf %128, %129 : vector<64x128xf32>
      %cst_46 = arith.constant 0.000000e+00 : f32
      %131 = vector.broadcast %cst_46 : f32 to vector<64x128xf32>
      %132 = arith.maximumf %110, %131 : vector<64x128xf32>
      %133 = arith.mulf %132, %130 : vector<64x128xf32>
      %134 = vector.broadcast %5 : vector<1x128xf32> to vector<64x128xf32>
      %135 = arith.mulf %133, %134 : vector<64x128xf32>
      %136 = arith.addf %100, %135 : vector<64x128xf32>
      %137 = vector.broadcast %18 : f32 to vector<64x128xf32>
      %138 = arith.mulf %137, %59 : vector<64x128xf32>
      %139 = vector.broadcast %19 : f32 to vector<64x128xf32>
      %140 = arith.mulf %139, %61 : vector<64x128xf32>
      %141 = arith.addf %138, %140 : vector<64x128xf32>
      %142 = vector.broadcast %20 : f32 to vector<64x128xf32>
      %143 = arith.mulf %142, %63 : vector<64x128xf32>
      %144 = arith.addf %141, %143 : vector<64x128xf32>
      %145 = vector.broadcast %42 : f32 to vector<64x128xf32>
      %146 = arith.addf %144, %145 : vector<64x128xf32>
      %147 = vector.broadcast %28 : f32 to vector<64x128xf32>
      %148 = arith.mulf %147, %59 : vector<64x128xf32>
      %149 = vector.broadcast %29 : f32 to vector<64x128xf32>
      %150 = arith.mulf %149, %61 : vector<64x128xf32>
      %151 = arith.addf %148, %150 : vector<64x128xf32>
      %152 = vector.broadcast %46 : f32 to vector<64x128xf32>
      %153 = arith.addf %151, %152 : vector<64x128xf32>
      %154 = vector.broadcast %36 : f32 to vector<64x128xf32>
      %155 = arith.mulf %154, %61 : vector<64x128xf32>
      %156 = vector.broadcast %37 : f32 to vector<64x128xf32>
      %157 = arith.mulf %156, %63 : vector<64x128xf32>
      %158 = arith.addf %155, %157 : vector<64x128xf32>
      %159 = vector.broadcast %50 : f32 to vector<64x128xf32>
      %160 = arith.addf %158, %159 : vector<64x128xf32>
      %161 = arith.mulf %153, %160 : vector<64x128xf32>
      %162 = arith.negf %161 : vector<64x128xf32>
      %163 = math.exp %162 : vector<64x128xf32>
      %cst_47 = arith.constant 1.000000e+00 : f32
      %164 = vector.broadcast %cst_47 : f32 to vector<64x128xf32>
      %165 = arith.addf %164, %163 : vector<64x128xf32>
      %166 = arith.divf %164, %165 : vector<64x128xf32>
      %cst_48 = arith.constant 0.000000e+00 : f32
      %167 = vector.broadcast %cst_48 : f32 to vector<64x128xf32>
      %168 = arith.maximumf %146, %167 : vector<64x128xf32>
      %169 = arith.mulf %168, %166 : vector<64x128xf32>
      %170 = vector.broadcast %8 : vector<1x128xf32> to vector<64x128xf32>
      %171 = arith.mulf %169, %170 : vector<64x128xf32>
      %172 = arith.addf %136, %171 : vector<64x128xf32>
      %173 = vector.broadcast %21 : f32 to vector<64x128xf32>
      %174 = arith.mulf %173, %59 : vector<64x128xf32>
      %175 = vector.broadcast %22 : f32 to vector<64x128xf32>
      %176 = arith.mulf %175, %61 : vector<64x128xf32>
      %177 = arith.addf %174, %176 : vector<64x128xf32>
      %178 = vector.broadcast %23 : f32 to vector<64x128xf32>
      %179 = arith.mulf %178, %63 : vector<64x128xf32>
      %180 = arith.addf %177, %179 : vector<64x128xf32>
      %181 = vector.broadcast %43 : f32 to vector<64x128xf32>
      %182 = arith.addf %180, %181 : vector<64x128xf32>
      %183 = vector.broadcast %30 : f32 to vector<64x128xf32>
      %184 = arith.mulf %183, %59 : vector<64x128xf32>
      %185 = vector.broadcast %31 : f32 to vector<64x128xf32>
      %186 = arith.mulf %185, %61 : vector<64x128xf32>
      %187 = arith.addf %184, %186 : vector<64x128xf32>
      %188 = vector.broadcast %47 : f32 to vector<64x128xf32>
      %189 = arith.addf %187, %188 : vector<64x128xf32>
      %190 = vector.broadcast %38 : f32 to vector<64x128xf32>
      %191 = arith.mulf %190, %61 : vector<64x128xf32>
      %192 = vector.broadcast %39 : f32 to vector<64x128xf32>
      %193 = arith.mulf %192, %63 : vector<64x128xf32>
      %194 = arith.addf %191, %193 : vector<64x128xf32>
      %195 = vector.broadcast %51 : f32 to vector<64x128xf32>
      %196 = arith.addf %194, %195 : vector<64x128xf32>
      %197 = arith.mulf %189, %196 : vector<64x128xf32>
      %198 = arith.negf %197 : vector<64x128xf32>
      %199 = math.exp %198 : vector<64x128xf32>
      %cst_49 = arith.constant 1.000000e+00 : f32
      %200 = vector.broadcast %cst_49 : f32 to vector<64x128xf32>
      %201 = arith.addf %200, %199 : vector<64x128xf32>
      %202 = arith.divf %200, %201 : vector<64x128xf32>
      %cst_50 = arith.constant 0.000000e+00 : f32
      %203 = vector.broadcast %cst_50 : f32 to vector<64x128xf32>
      %204 = arith.maximumf %182, %203 : vector<64x128xf32>
      %205 = arith.mulf %204, %202 : vector<64x128xf32>
      %206 = vector.broadcast %11 : vector<1x128xf32> to vector<64x128xf32>
      %207 = arith.mulf %205, %206 : vector<64x128xf32>
      %208 = arith.addf %172, %207 : vector<64x128xf32>
      %cst_51 = arith.constant dense<0.000000e+00> : vector<64xf32>
      %209 = vector.multi_reduction <add>, %208, %cst_51 [1] : vector<64x128xf32> to vector<64xf32>
      %210 = vector.shape_cast %209 : vector<64xf32> to vector<64x1xf32>
      %211 = vector.broadcast %52 : f32 to vector<64x1xf32>
      %212 = arith.addf %210, %211 : vector<64x1xf32>
      %213 = arith.index_cast %57 : i32 to index
      %c0_52 = arith.constant 0 : index
      %214 = vector.load %arg12[%213, %c0_52] : memref<128x1xf32, #tpu.memory_space<vmem>>, vector<64x1xf32>
      tpu.vector_store %arg12[%213, %c0_52], %212 {strides = array<i32>} : memref<128x1xf32, #tpu.memory_space<vmem>>, vector<64x1xf32>,
    }
    %c2_i32_37 = arith.constant 2 : i32
    return
  }
  func.func @transform_0(%arg0: i32) -> (i32, i32) {
    %c0_i32 = arith.constant 0 : i32
    %c0_i32_0 = arith.constant 0 : i32
    return %arg0, %c0_i32 : i32, i32
  }
  func.func @transform_1(%arg0: i32) -> (i32, i32) {
    %c0_i32 = arith.constant 0 : i32
    %c0_i32_0 = arith.constant 0 : i32
    return %arg0, %c0_i32 : i32, i32
  }
  func.func @transform_2(%arg0: i32) -> (i32, i32) {
    %c0_i32 = arith.constant 0 : i32
    %c0_i32_0 = arith.constant 0 : i32
    return %arg0, %c0_i32 : i32, i32
  }
  func.func @transform_3(%arg0: i32) -> i32 {
    %c0_i32 = arith.constant 0 : i32
    %c0_i32_0 = arith.constant 0 : i32
    return %c0_i32 : i32
  }
  func.func @transform_4(%arg0: i32) -> i32 {
    %c0_i32 = arith.constant 0 : i32
    %c0_i32_0 = arith.constant 0 : i32
    return %c0_i32 : i32
  }
  func.func @transform_5(%arg0: i32) -> i32 {
    %c0_i32 = arith.constant 0 : i32
    %c0_i32_0 = arith.constant 0 : i32
    return %c0_i32 : i32
  }
  func.func @transform_6(%arg0: i32) -> i32 {
    %c0_i32 = arith.constant 0 : i32
    %c0_i32_0 = arith.constant 0 : i32
    return %c0_i32 : i32
  }
  func.func @transform_7(%arg0: i32) -> i32 {
    %c0_i32 = arith.constant 0 : i32
    %c0_i32_0 = arith.constant 0 : i32
    return %c0_i32 : i32
  }
  func.func @transform_8(%arg0: i32) -> i32 {
    %c0_i32 = arith.constant 0 : i32
    %c0_i32_0 = arith.constant 0 : i32
    return %c0_i32 : i32
  }
  func.func @transform_9(%arg0: i32) -> (i32, i32) {
    %c0_i32 = arith.constant 0 : i32
    %c0_i32_0 = arith.constant 0 : i32
    %c0_i32_1 = arith.constant 0 : i32
    return %c0_i32, %c0_i32_0 : i32, i32
  }
  func.func @transform_10(%arg0: i32) -> i32 {
    %c0_i32 = arith.constant 0 : i32
    %c0_i32_0 = arith.constant 0 : i32
    return %c0_i32 : i32
  }
  func.func @transform_11(%arg0: i32) -> (i32, i32) {
    %c0_i32 = arith.constant 0 : i32
    %c0_i32_0 = arith.constant 0 : i32
    return %arg0, %c0_i32 : i32, i32
  }
}

</mosaic_0001>

<llo_original>
// kernel: tpu_custom_call.1
$region0: #{tpu_custom_call.1}
  #allocation0 [shape = 'u32[]', space=smem, size = 0x4, offset = 0x4, fixed_abs, tag = 'smem constant byte address 0x4 - core index']
  #allocation1 [shape = 'u32[144,128]{1,0:T(1,128)}', space=vmem, size = 0x12000, scoped, tag = 'internal scratch']
  #allocation2 [shape = 'f32[1]{0:T(128)S(6)}', space=smem, size = 0x200, scoped, tag = 'scoped memory for tpu_custom_call.1']
  %s0 = inlined_call_operand.hbm [shape: f32[100,128], index: 0, kind: input, shape index: {}]
  %s1 = inlined_call_operand.hbm [shape: f32[100,128], index: 1, kind: input, shape index: {}]
  %s2 = inlined_call_operand.hbm [shape: f32[100,128], index: 2, kind: input, shape index: {}]
  %s3 = inlined_call_operand.vmem [shape: f32[12], index: 3, kind: input, shape index: {}]
  %s4 = inlined_call_operand.vmem [shape: f32[4], index: 4, kind: input, shape index: {}]
  %s5 = inlined_call_operand.vmem [shape: f32[8], index: 5, kind: input, shape index: {}]
  %s6 = inlined_call_operand.vmem [shape: f32[4], index: 6, kind: input, shape index: {}]
  %s7 = inlined_call_operand.vmem [shape: f32[8], index: 7, kind: input, shape index: {}]
  %s8 = inlined_call_operand.vmem [shape: f32[4], index: 8, kind: input, shape index: {}]
  %s9 = inlined_call_operand.vmem [shape: f32[4,128], index: 9, kind: input, shape index: {}]
  %s10 = inlined_call_operand.<no memory space> [shape: f32[1], index: 10, kind: input, shape index: {}]
  %s11 = inlined_call_operand.vmem [shape: f32[100,1], index: 11, kind: output, shape index: {}]
  %s12 = sld [smem:[#allocation0]]
  $region131: #{tpu_custom_call.1} parent=0
    _
  %s14 = ssub.s32 1, %s12
  %s15 = scalar_select 0, %s14, %s12
  %16 = sst [smem:[#allocation2]] %s10
  $region1: #{tpu_custom_call.1} parent=0
    #allocation3 [shape = 'u8[65536]{0}', space=vmem, size = 0x10000, scoped, tag = 'input window, operand 0, single buffered']
    #allocation4 [shape = 's32[1]{0}', space=sflag, size = 0x4, scoped, tag = 'scoped memory for tpu_custom_call.1']
    #allocation5 [shape = 's32[1]{0}', space=sflag, size = 0x4, scoped, tag = 'scoped memory for tpu_custom_call.1']
    #allocation6 [shape = 'u8[65536]{0}', space=vmem, size = 0x10000, scoped, tag = 'input window, operand 1, single buffered']
    #allocation7 [shape = 's32[1]{0}', space=sflag, size = 0x4, scoped, tag = 'scoped memory for tpu_custom_call.1']
    #allocation8 [shape = 'u8[65536]{0}', space=vmem, size = 0x10000, scoped, tag = 'input window, operand 2, single buffered']
    #allocation9 [shape = 'u8[512]{0}', space=smem, size = 0x200, scoped, tag = 'input window, operand 3, single buffered']
    #allocation10 [shape = 'u8[512]{0}', space=smem, size = 0x200, scoped, tag = 'input window, operand 4, single buffered']
    #allocation11 [shape = 's32[1]{0}', space=sflag, size = 0x4, scoped, tag = 'scoped memory for tpu_custom_call.1']
    #allocation12 [shape = 'u8[512]{0}', space=smem, size = 0x200, scoped, tag = 'input window, operand 5, single buffered']
    #allocation13 [shape = 'u8[512]{0}', space=smem, size = 0x200, scoped, tag = 'input window, operand 6, single buffered']
    #allocation14 [shape = 's32[1]{0}', space=sflag, size = 0x4, scoped, tag = 'scoped memory for tpu_custom_call.1']
    #allocation15 [shape = 'u8[512]{0}', space=smem, size = 0x200, scoped, tag = 'input window, operand 7, single buffered']
    #allocation16 [shape = 'u8[512]{0}', space=smem, size = 0x200, scoped, tag = 'input window, operand 8, single buffered']
    #allocation17 [shape = 's32[1]{0}', space=sflag, size = 0x4, scoped, tag = 'scoped memory for tpu_custom_call.1']
    #allocation18 [shape = 'u8[65536]{0}', space=vmem, size = 0x10000, scoped, tag = 'output window, operand 0, single buffered']
    %17 = vsyncpa [#allocation4], 0
    %18 = vsyncpa [#allocation7], 0
    %19 = vsyncpa [#allocation5], 0
    %20 = vsyncpa [#allocation11], 0
    %21 = vsyncpa [#allocation14], 0
    %22 = vsyncpa [#allocation17], 0
    // Predicated region
    $region2: #{tpu_custom_call.1} parent=1 // pred_check
      _
    $region3: #{tpu_custom_call.1} parent=1 // pred_check_branch
      %24 = sbr.rel (0) target = $region5
    $region4: #{tpu_custom_call.1} parent=1 // pred_region
      %s26 = ssub.s32 2048, 1664
      %27 = vsyncadd [#allocation4], %s26
      %s28 = sshll.u32 [#allocation3], 4
      %s29 = int_to_ptr.vmem [resolvable:$true] %s28
      %34 = dma.hbm_to_vmem [thread:$0]  %s0, 1664, %s29, [#allocation4], 128, 128, 8
    $region5: #{tpu_custom_call.1} parent=1 // pred_fallthru
      _
    // Predicated region
    $region6: #{tpu_custom_call.1} parent=1 // pred_check
      _
    $region7: #{tpu_custom_call.1} parent=1 // pred_check_branch
      %36 = sbr.rel (0) target = $region9
    $region8: #{tpu_custom_call.1} parent=1 // pred_region
      %s38 = ssub.s32 2048, 1664
      %39 = vsyncadd [#allocation7], %s38
      %s40 = sshll.u32 [#allocation6], 4
      %s41 = int_to_ptr.vmem [resolvable:$true] %s40
      %46 = dma.hbm_to_vmem [thread:$0]  %s1, 1664, %s41, [#allocation7], 128, 128, 8
    $region9: #{tpu_custom_call.1} parent=1 // pred_fallthru
      _
    // Predicated region
    $region10: #{tpu_custom_call.1} parent=1 // pred_check
      _
    $region11: #{tpu_custom_call.1} parent=1 // pred_check_branch
      %48 = sbr.rel (0) target = $region13
    $region12: #{tpu_custom_call.1} parent=1 // pred_region
      %s50 = ssub.s32 2048, 1664
      %51 = vsyncadd [#allocation7], %s50
      %s52 = sshll.u32 [#allocation8], 4
      %s53 = int_to_ptr.vmem [resolvable:$true] %s52
      %58 = dma.hbm_to_vmem [thread:$0]  %s2, 1664, %s53, [#allocation7], 128, 128, 8
    $region13: #{tpu_custom_call.1} parent=1 // pred_fallthru
      _
    // Predicated region
    $region14: #{tpu_custom_call.1} parent=1 // pred_check
      _
    $region15: #{tpu_custom_call.1} parent=1 // pred_check_branch
      %60 = sbr.rel (0) target = $region17
    $region16: #{tpu_custom_call.1} parent=1 // pred_region
      %s62 = ssub.s32 16, 16
      %63 = vsyncadd [#allocation5], %s62
      %s65 = sshll.u32 %s3, 4
      %s66 = int_to_ptr.vmem [resolvable:$true] %s65
      %68 = dma.vmem_to_smem %s66, 16, [#allocation9], [#allocation5]
    $region17: #{tpu_custom_call.1} parent=1 // pred_fallthru
      _
    // Predicated region
    $region18: #{tpu_custom_call.1} parent=1 // pred_check
      _
    $region19: #{tpu_custom_call.1} parent=1 // pred_check_branch
      %70 = sbr.rel (0) target = $region21
    $region20: #{tpu_custom_call.1} parent=1 // pred_region
      %s72 = ssub.s32 16, 16
      %73 = vsyncadd [#allocation11], %s72
      %s75 = sshll.u32 %s4, 4
      %s76 = int_to_ptr.vmem [resolvable:$true] %s75
      %78 = dma.vmem_to_smem %s76, 16, [#allocation10], [#allocation11]
    $region21: #{tpu_custom_call.1} parent=1 // pred_fallthru
      _
    // Predicated region
    $region22: #{tpu_custom_call.1} parent=1 // pred_check
      _
    $region23: #{tpu_custom_call.1} parent=1 // pred_check_branch
      %80 = sbr.rel (0) target = $region25
    $region24: #{tpu_custom_call.1} parent=1 // pred_region
      %s82 = ssub.s32 16, 16
      %83 = vsyncadd [#allocation11], %s82
      %s85 = sshll.u32 %s5, 4
      %s86 = int_to_ptr.vmem [resolvable:$true] %s85
      %88 = dma.vmem_to_smem %s86, 16, [#allocation12], [#allocation11]
    $region25: #{tpu_custom_call.1} parent=1 // pred_fallthru
      _
    // Predicated region
    $region26: #{tpu_custom_call.1} parent=1 // pred_check
      _
    $region27: #{tpu_custom_call.1} parent=1 // pred_check_branch
      %90 = sbr.rel (0) target = $region29
    $region28: #{tpu_custom_call.1} parent=1 // pred_region
      %s92 = ssub.s32 16, 16
      %93 = vsyncadd [#allocation14], %s92
      %s95 = sshll.u32 %s6, 4
      %s96 = int_to_ptr.vmem [resolvable:$true] %s95
      %98 = dma.vmem_to_smem %s96, 16, [#allocation13], [#allocation14]
    $region29: #{tpu_custom_call.1} parent=1 // pred_fallthru
      _
    // Predicated region
    $region30: #{tpu_custom_call.1} parent=1 // pred_check
      _
    $region31: #{tpu_custom_call.1} parent=1 // pred_check_branch
      %100 = sbr.rel (0) target = $region33
    $region32: #{tpu_custom_call.1} parent=1 // pred_region
      %s102 = ssub.s32 16, 16
      %103 = vsyncadd [#allocation14], %s102
      %s105 = sshll.u32 %s7, 4
      %s106 = int_to_ptr.vmem [resolvable:$true] %s105
      %108 = dma.vmem_to_smem %s106, 16, [#allocation15], [#allocation14]
    $region33: #{tpu_custom_call.1} parent=1 // pred_fallthru
      _
    // Predicated region
    $region34: #{tpu_custom_call.1} parent=1 // pred_check
      _
    $region35: #{tpu_custom_call.1} parent=1 // pred_check_branch
      %110 = sbr.rel (0) target = $region37
    $region36: #{tpu_custom_call.1} parent=1 // pred_region
      %s112 = ssub.s32 16, 16
      %113 = vsyncadd [#allocation17], %s112
      %s115 = sshll.u32 %s8, 4
      %s116 = int_to_ptr.vmem [resolvable:$true] %s115
      %118 = dma.vmem_to_smem %s116, 16, [#allocation16], [#allocation17]
    $region37: #{tpu_custom_call.1} parent=1 // pred_fallthru
      _
    // Predicated region
    $region38: #{tpu_custom_call.1} parent=1 // pred_check
      _
    $region39: #{tpu_custom_call.1} parent=1 // pred_check_branch
      %120 = sbr.rel (0) target = $region41
    $region40: #{tpu_custom_call.1} parent=1 // pred_region
      _
    $region41: #{tpu_custom_call.1} parent=1 // pred_fallthru
      _
    // Predicated region
    $region42: #{tpu_custom_call.1} parent=1 // pred_check
      _
    $region43: #{tpu_custom_call.1} parent=1 // pred_check_branch
      %122 = sbr.rel (0) target = $region45
    $region44: #{tpu_custom_call.1} parent=1 // pred_region
      _
    $region45: #{tpu_custom_call.1} parent=1 // pred_fallthru
      _
    // Predicated region
    $region46: #{tpu_custom_call.1} parent=1 // pred_check
      _
    $region47: #{tpu_custom_call.1} parent=1 // pred_check_branch
      %124 = sbr.rel (0) target = $region49
    $region48: #{tpu_custom_call.1} parent=1 // pred_region
      %125 = dma.done [#allocation4], 2048
    $region49: #{tpu_custom_call.1} parent=1 // pred_fallthru
      _
    // Predicated region
    $region50: #{tpu_custom_call.1} parent=1 // pred_check
      _
    $region51: #{tpu_custom_call.1} parent=1 // pred_check_branch
      %127 = sbr.rel (0) target = $region53
    $region52: #{tpu_custom_call.1} parent=1 // pred_region
      %128 = dma.done [#allocation7], 2048
    $region53: #{tpu_custom_call.1} parent=1 // pred_fallthru
      _
    // Predicated region
    $region54: #{tpu_custom_call.1} parent=1 // pred_check
      _
    $region55: #{tpu_custom_call.1} parent=1 // pred_check_branch
      %130 = sbr.rel (0) target = $region57
    $region56: #{tpu_custom_call.1} parent=1 // pred_region
      %131 = dma.done [#allocation7], 2048
    $region57: #{tpu_custom_call.1} parent=1 // pred_fallthru
      _
    // Predicated region
    $region58: #{tpu_custom_call.1} parent=1 // pred_check
      _
    $region59: #{tpu_custom_call.1} parent=1 // pred_check_branch
      %133 = sbr.rel (0) target = $region61
    $region60: #{tpu_custom_call.1} parent=1 // pred_region
      %134 = dma.done [#allocation5], 16
    $region61: #{tpu_custom_call.1} parent=1 // pred_fallthru
      _
    // Predicated region
    $region62: #{tpu_custom_call.1} parent=1 // pred_check
      _
    $region63: #{tpu_custom_call.1} parent=1 // pred_check_branch
      %136 = sbr.rel (0) target = $region65
    $region64: #{tpu_custom_call.1} parent=1 // pred_region
      %137 = dma.done [#allocation11], 16
    $region65: #{tpu_custom_call.1} parent=1 // pred_fallthru
      _
    // Predicated region
    $region66: #{tpu_custom_call.1} parent=1 // pred_check
      _
    $region67: #{tpu_custom_call.1} parent=1 // pred_check_branch
      %139 = sbr.rel (0) target = $region69
    $region68: #{tpu_custom_call.1} parent=1 // pred_region
      %140 = dma.done [#allocation11], 16
    $region69: #{tpu_custom_call.1} parent=1 // pred_fallthru
      _
    // Predicated region
    $region70: #{tpu_custom_call.1} parent=1 // pred_check
      _
    $region71: #{tpu_custom_call.1} parent=1 // pred_check_branch
      %142 = sbr.rel (0) target = $region73
    $region72: #{tpu_custom_call.1} parent=1 // pred_region
      %143 = dma.done [#allocation14], 16
    $region73: #{tpu_custom_call.1} parent=1 // pred_fallthru
      _
    // Predicated region
    $region74: #{tpu_custom_call.1} parent=1 // pred_check
      _
    $region75: #{tpu_custom_call.1} parent=1 // pred_check_branch
      %145 = sbr.rel (0) target = $region77
    $region76: #{tpu_custom_call.1} parent=1 // pred_region
      %146 = dma.done [#allocation14], 16
    $region77: #{tpu_custom_call.1} parent=1 // pred_fallthru
      _
    // Predicated region
    $region78: #{tpu_custom_call.1} parent=1 // pred_check
      _
    $region79: #{tpu_custom_call.1} parent=1 // pred_check_branch
      %148 = sbr.rel (0) target = $region81
    $region80: #{tpu_custom_call.1} parent=1 // pred_region
      %149 = dma.done [#allocation17], 16
    $region81: #{tpu_custom_call.1} parent=1 // pred_fallthru
      _
    %150 = sfence
    %v151 = vld [vmem:[%s9] sm:$0x1]
    %v152 = vld [vmem:[%s9 + $0x1] sm:$0x1]
    %v153 = vld [vmem:[%s9 + $0x2] sm:$0x1]
    %v154 = vld [vmem:[%s9 + $0x3] sm:$0x1]
    %s155 = sld [smem:[#allocation9]]
    %s156 = sld [smem:[#allocation9 + $0x1]]
    %s157 = sld [smem:[#allocation9 + $0x2]]
    %s158 = sld [smem:[#allocation9 + $0x3]]
    %s159 = sld [smem:[#allocation9 + $0x4]]
    %s160 = sld [smem:[#allocation9 + $0x5]]
    %s161 = sld [smem:[#allocation9 + $0x6]]
    %s162 = sld [smem:[#allocation9 + $0x7]]
    %s163 = sld [smem:[#allocation9 + $0x8]]
    %s164 = sld [smem:[#allocation9 + $0x9]]
    %s165 = sld [smem:[#allocation9 + $0xa]]
    %s166 = sld [smem:[#allocation9 + $0xb]]
    %s167 = sld [smem:[#allocation12]]
    %s168 = sld [smem:[#allocation12 + $0x1]]
    %s169 = sld [smem:[#allocation12 + $0x2]]
    %s170 = sld [smem:[#allocation12 + $0x3]]
    %s171 = sld [smem:[#allocation12 + $0x4]]
    %s172 = sld [smem:[#allocation12 + $0x5]]
    %s173 = sld [smem:[#allocation12 + $0x6]]
    %s174 = sld [smem:[#allocation12 + $0x7]]
    %s175 = sld [smem:[#allocation15]]
    %s176 = sld [smem:[#allocation15 + $0x1]]
    %s177 = sld [smem:[#allocation15 + $0x2]]
    %s178 = sld [smem:[#allocation15 + $0x3]]
    %s179 = sld [smem:[#allocation15 + $0x4]]
    %s180 = sld [smem:[#allocation15 + $0x5]]
    %s181 = sld [smem:[#allocation15 + $0x6]]
    %s182 = sld [smem:[#allocation15 + $0x7]]
    %s183 = sld [smem:[#allocation10]]
    %s184 = sld [smem:[#allocation10 + $0x1]]
    %s185 = sld [smem:[#allocation10 + $0x2]]
    %s186 = sld [smem:[#allocation10 + $0x3]]
    %s187 = sld [smem:[#allocation13]]
    %s188 = sld [smem:[#allocation13 + $0x1]]
    %s189 = sld [smem:[#allocation13 + $0x2]]
    %s190 = sld [smem:[#allocation13 + $0x3]]
    %s191 = sld [smem:[#allocation16]]
    %s192 = sld [smem:[#allocation16 + $0x1]]
    %s193 = sld [smem:[#allocation16 + $0x2]]
    %s194 = sld [smem:[#allocation16 + $0x3]]
    %s195 = sld [smem:[#allocation2]]
    loop: start=0, step=1, limit=2
    $region82: #{tpu_custom_call.1} parent=1 // loop_pre_header
      _
    $region83: #{tpu_custom_call.1} parent=1 // loop_header
      %s197 = sphi 0, %s201
      %p198 = scmp.ge.s32.totalorder %s197, 2
    $region84: #{tpu_custom_call.1} parent=1 // loop_header_branch
      %200 = sbr.rel (%p198) target = $region88
    $region85: #{tpu_custom_call.1} parent=1 // loop_body
      %s202 = smul.u32 %s197, 64
      %s203 = scalar_lea.vmem [#allocation3], %s202
      %v204 = vld [vmem:[%s203] sm:$0xff]
      %v205 = vld [vmem:[%s203 + $0x8] sm:$0xff]
      %v206 = vld [vmem:[%s203 + $0x10] sm:$0xff]
      %v207 = vld [vmem:[%s203 + $0x18] sm:$0xff]
      %v208 = vld [vmem:[%s203 + $0x20] sm:$0xff]
      %v209 = vld [vmem:[%s203 + $0x28] sm:$0xff]
      %v210 = vld [vmem:[%s203 + $0x30] sm:$0xff]
      %v211 = vld [vmem:[%s203 + $0x38] sm:$0xff]
      %s212 = scalar_lea.vmem [#allocation6], %s202
      %v213 = vld [vmem:[%s212] sm:$0xff]
      %v214 = vld [vmem:[%s212 + $0x8] sm:$0xff]
      %v215 = vld [vmem:[%s212 + $0x10] sm:$0xff]
      %v216 = vld [vmem:[%s212 + $0x18] sm:$0xff]
      %v217 = vld [vmem:[%s212 + $0x20] sm:$0xff]
      %v218 = vld [vmem:[%s212 + $0x28] sm:$0xff]
      %v219 = vld [vmem:[%s212 + $0x30] sm:$0xff]
      %v220 = vld [vmem:[%s212 + $0x38] sm:$0xff]
      %s221 = scalar_lea.vmem [#allocation8], %s202
      %v222 = vld [vmem:[%s221] sm:$0xff]
      %v223 = vld [vmem:[%s221 + $0x8] sm:$0xff]
      %v224 = vld [vmem:[%s221 + $0x10] sm:$0xff]
      %v225 = vld [vmem:[%s221 + $0x18] sm:$0xff]
      %v226 = vld [vmem:[%s221 + $0x20] sm:$0xff]
      %v227 = vld [vmem:[%s221 + $0x28] sm:$0xff]
      %v228 = vld [vmem:[%s221 + $0x30] sm:$0xff]
      %v229 = vld [vmem:[%s221 + $0x38] sm:$0xff]
      %v230 = vstv %s155
      %v231 = vmul.f32 %v230, %v204
      %v232 = vmul.f32 %v230, %v205
      %v233 = vmul.f32 %v230, %v206
      %v234 = vmul.f32 %v230, %v207
      %v235 = vmul.f32 %v230, %v208
      %v236 = vmul.f32 %v230, %v209
      %v237 = vmul.f32 %v230, %v210
      %v238 = vmul.f32 %v230, %v211
      %v239 = vstv %s156
      %v240 = vmul.f32 %v239, %v213
      %v241 = vmul.f32 %v239, %v214
      %v242 = vmul.f32 %v239, %v215
      %v243 = vmul.f32 %v239, %v216
      %v244 = vmul.f32 %v239, %v217
      %v245 = vmul.f32 %v239, %v218
      %v246 = vmul.f32 %v239, %v219
      %v247 = vmul.f32 %v239, %v220
      %v248 = vadd.f32 %v231, %v240
      %v249 = vadd.f32 %v232, %v241
      %v250 = vadd.f32 %v233, %v242
      %v251 = vadd.f32 %v234, %v243
      %v252 = vadd.f32 %v235, %v244
      %v253 = vadd.f32 %v236, %v245
      %v254 = vadd.f32 %v237, %v246
      %v255 = vadd.f32 %v238, %v247
      %v256 = vstv %s157
      %v257 = vmul.f32 %v256, %v222
      %v258 = vmul.f32 %v256, %v223
      %v259 = vmul.f32 %v256, %v224
      %v260 = vmul.f32 %v256, %v225
      %v261 = vmul.f32 %v256, %v226
      %v262 = vmul.f32 %v256, %v227
      %v263 = vmul.f32 %v256, %v228
      %v264 = vmul.f32 %v256, %v229
      %v265 = vadd.f32 %v248, %v257
      %v266 = vadd.f32 %v249, %v258
      %v267 = vadd.f32 %v250, %v259
      %v268 = vadd.f32 %v251, %v260
      %v269 = vadd.f32 %v252, %v261
      %v270 = vadd.f32 %v253, %v262
      %v271 = vadd.f32 %v254, %v263
      %v272 = vadd.f32 %v255, %v264
      %v273 = vstv %s183
      %v274 = vadd.f32 %v265, %v273
      %v275 = vadd.f32 %v266, %v273
      %v276 = vadd.f32 %v267, %v273
      %v277 = vadd.f32 %v268, %v273
      %v278 = vadd.f32 %v269, %v273
      %v279 = vadd.f32 %v270, %v273
      %v280 = vadd.f32 %v271, %v273
      %v281 = vadd.f32 %v272, %v273
      %v282 = vstv %s167
      %v283 = vmul.f32 %v282, %v204
      %v284 = vmul.f32 %v282, %v205
      %v285 = vmul.f32 %v282, %v206
      %v286 = vmul.f32 %v282, %v207
      %v287 = vmul.f32 %v282, %v208
      %v288 = vmul.f32 %v282, %v209
      %v289 = vmul.f32 %v282, %v210
      %v290 = vmul.f32 %v282, %v211
      %v291 = vstv %s168
      %v292 = vmul.f32 %v291, %v213
      %v293 = vmul.f32 %v291, %v214
      %v294 = vmul.f32 %v291, %v215
      %v295 = vmul.f32 %v291, %v216
      %v296 = vmul.f32 %v291, %v217
      %v297 = vmul.f32 %v291, %v218
      %v298 = vmul.f32 %v291, %v219
      %v299 = vmul.f32 %v291, %v220
      %v300 = vadd.f32 %v283, %v292
      %v301 = vadd.f32 %v284, %v293
      %v302 = vadd.f32 %v285, %v294
      %v303 = vadd.f32 %v286, %v295
      %v304 = vadd.f32 %v287, %v296
      %v305 = vadd.f32 %v288, %v297
      %v306 = vadd.f32 %v289, %v298
      %v307 = vadd.f32 %v290, %v299
      %v308 = vstv %s187
      %v309 = vadd.f32 %v300, %v308
      %v310 = vadd.f32 %v301, %v308
      %v311 = vadd.f32 %v302, %v308
      %v312 = vadd.f32 %v303, %v308
      %v313 = vadd.f32 %v304, %v308
      %v314 = vadd.f32 %v305, %v308
      %v315 = vadd.f32 %v306, %v308
      %v316 = vadd.f32 %v307, %v308
      %v317 = vstv %s175
      %v318 = vmul.f32 %v317, %v213
      %v319 = vmul.f32 %v317, %v214
      %v320 = vmul.f32 %v317, %v215
      %v321 = vmul.f32 %v317, %v216
      %v322 = vmul.f32 %v317, %v217
      %v323 = vmul.f32 %v317, %v218
      %v324 = vmul.f32 %v317, %v219
      %v325 = vmul.f32 %v317, %v220
      %v326 = vstv %s176
      %v327 = vmul.f32 %v326, %v222
      %v328 = vmul.f32 %v326, %v223
      %v329 = vmul.f32 %v326, %v224
      %v330 = vmul.f32 %v326, %v225
      %v331 = vmul.f32 %v326, %v226
      %v332 = vmul.f32 %v326, %v227
      %v333 = vmul.f32 %v326, %v228
      %v334 = vmul.f32 %v326, %v229
      %v335 = vadd.f32 %v318, %v327
      %v336 = vadd.f32 %v319, %v328
      %v337 = vadd.f32 %v320, %v329
      %v338 = vadd.f32 %v321, %v330
      %v339 = vadd.f32 %v322, %v331
      %v340 = vadd.f32 %v323, %v332
      %v341 = vadd.f32 %v324, %v333
      %v342 = vadd.f32 %v325, %v334
      %v343 = vstv %s191
      %v344 = vadd.f32 %v335, %v343
      %v345 = vadd.f32 %v336, %v343
      %v346 = vadd.f32 %v337, %v343
      %v347 = vadd.f32 %v338, %v343
      %v348 = vadd.f32 %v339, %v343
      %v349 = vadd.f32 %v340, %v343
      %v350 = vadd.f32 %v341, %v343
      %v351 = vadd.f32 %v342, %v343
      %v352 = vmul.f32 %v309, %v344
      %v353 = vmul.f32 %v310, %v345
      %v354 = vmul.f32 %v311, %v346
      %v355 = vmul.f32 %v312, %v347
      %v356 = vmul.f32 %v313, %v348
      %v357 = vmul.f32 %v314, %v349
      %v358 = vmul.f32 %v315, %v350
      %v359 = vmul.f32 %v316, %v351
      %v360 = vxor.u32 %v352, 2147483648
      %v361 = vxor.u32 %v353, 2147483648
      %v362 = vxor.u32 %v354, 2147483648
      %v363 = vxor.u32 %v355, 2147483648
      %v364 = vxor.u32 %v356, 2147483648
      %v365 = vxor.u32 %v357, 2147483648
      %v366 = vxor.u32 %v358, 2147483648
      %v367 = vxor.u32 %v359, 2147483648
      %v368 = vmul.f32 %v360, 1.442695
      %v369 = vpow.pop %v368
      %v370 = vmul.f32 %v361, 1.442695
      %v371 = vpow.pop %v370
      %v372 = vmul.f32 %v362, 1.442695
      %v373 = vpow.pop %v372
      %v374 = vmul.f32 %v363, 1.442695
      %v375 = vpow.pop %v374
      %v376 = vmul.f32 %v364, 1.442695
      %v377 = vpow.pop %v376
      %v378 = vmul.f32 %v365, 1.442695
      %v379 = vpow.pop %v378
      %v380 = vmul.f32 %v366, 1.442695
      %v381 = vpow.pop %v380
      %v382 = vmul.f32 %v367, 1.442695
      %v383 = vpow.pop %v382
      %v384 = vadd.f32 %v369, 1.0
      %v385 = vadd.f32 %v371, 1.0
      %v386 = vadd.f32 %v373, 1.0
      %v387 = vadd.f32 %v375, 1.0
      %v388 = vadd.f32 %v377, 1.0
      %v389 = vadd.f32 %v379, 1.0
      %v390 = vadd.f32 %v381, 1.0
      %v391 = vadd.f32 %v383, 1.0
      %v392 = vrcp.pop %v384
      %v393 = vmul.f32 1.0, %v392
      %v394 = vrcp.pop %v385
      %v395 = vmul.f32 1.0, %v394
      %v396 = vrcp.pop %v386
      %v397 = vmul.f32 1.0, %v396
      %v398 = vrcp.pop %v387
      %v399 = vmul.f32 1.0, %v398
      %v400 = vrcp.pop %v388
      %v401 = vmul.f32 1.0, %v400
      %v402 = vrcp.pop %v389
      %v403 = vmul.f32 1.0, %v402
      %v404 = vrcp.pop %v390
      %v405 = vmul.f32 1.0, %v404
      %v406 = vrcp.pop %v391
      %v407 = vmul.f32 1.0, %v406
      %v408 = vmax.f32 %v274, 0.0
      %v409 = vmax.f32 %v275, 0.0
      %v410 = vmax.f32 %v276, 0.0
      %v411 = vmax.f32 %v277, 0.0
      %v412 = vmax.f32 %v278, 0.0
      %v413 = vmax.f32 %v279, 0.0
      %v414 = vmax.f32 %v280, 0.0
      %v415 = vmax.f32 %v281, 0.0
      %v416 = vmul.f32 %v408, %v393
      %v417 = vmul.f32 %v409, %v395
      %v418 = vmul.f32 %v410, %v397
      %v419 = vmul.f32 %v411, %v399
      %v420 = vmul.f32 %v412, %v401
      %v421 = vmul.f32 %v413, %v403
      %v422 = vmul.f32 %v414, %v405
      %v423 = vmul.f32 %v415, %v407
      %v424 = vlaneseq
      %v425 = vshrl.u32 %v424, 7
      %v426 = vsub.s32 0, %v425
      %v427 = vrot.slane %v151, %v426
      %v428 = vmul.f32 %v416, %v427
      %v429 = vmul.f32 %v417, %v427
      %v430 = vmul.f32 %v418, %v427
      %v431 = vmul.f32 %v419, %v427
      %v432 = vmul.f32 %v420, %v427
      %v433 = vmul.f32 %v421, %v427
      %v434 = vmul.f32 %v422, %v427
      %v435 = vmul.f32 %v423, %v427
      %v436 = vadd.f32 %v428, 0.0
      %v437 = vadd.f32 %v429, 0.0
      %v438 = vadd.f32 %v430, 0.0
      %v439 = vadd.f32 %v431, 0.0
      %v440 = vadd.f32 %v432, 0.0
      %v441 = vadd.f32 %v433, 0.0
      %v442 = vadd.f32 %v434, 0.0
      %v443 = vadd.f32 %v435, 0.0
      %v444 = vstv %s158
      %v445 = vmul.f32 %v444, %v204
      %v446 = vmul.f32 %v444, %v205
      %v447 = vmul.f32 %v444, %v206
      %v448 = vmul.f32 %v444, %v207
      %v449 = vmul.f32 %v444, %v208
      %v450 = vmul.f32 %v444, %v209
      %v451 = vmul.f32 %v444, %v210
      %v452 = vmul.f32 %v444, %v211
      %v453 = vstv %s159
      %v454 = vmul.f32 %v453, %v213
      %v455 = vmul.f32 %v453, %v214
      %v456 = vmul.f32 %v453, %v215
      %v457 = vmul.f32 %v453, %v216
      %v458 = vmul.f32 %v453, %v217
      %v459 = vmul.f32 %v453, %v218
      %v460 = vmul.f32 %v453, %v219
      %v461 = vmul.f32 %v453, %v220
      %v462 = vadd.f32 %v445, %v454
      %v463 = vadd.f32 %v446, %v455
      %v464 = vadd.f32 %v447, %v456
      %v465 = vadd.f32 %v448, %v457
      %v466 = vadd.f32 %v449, %v458
      %v467 = vadd.f32 %v450, %v459
      %v468 = vadd.f32 %v451, %v460
      %v469 = vadd.f32 %v452, %v461
      %v470 = vstv %s160
      %v471 = vmul.f32 %v470, %v222
      %v472 = vmul.f32 %v470, %v223
      %v473 = vmul.f32 %v470, %v224
      %v474 = vmul.f32 %v470, %v225
      %v475 = vmul.f32 %v470, %v226
      %v476 = vmul.f32 %v470, %v227
      %v477 = vmul.f32 %v470, %v228
      %v478 = vmul.f32 %v470, %v229
      %v479 = vadd.f32 %v462, %v471
      %v480 = vadd.f32 %v463, %v472
      %v481 = vadd.f32 %v464, %v473
      %v482 = vadd.f32 %v465, %v474
      %v483 = vadd.f32 %v466, %v475
      %v484 = vadd.f32 %v467, %v476
      %v485 = vadd.f32 %v468, %v477
      %v486 = vadd.f32 %v469, %v478
      %v487 = vstv %s184
      %v488 = vadd.f32 %v479, %v487
      %v489 = vadd.f32 %v480, %v487
      %v490 = vadd.f32 %v481, %v487
      %v491 = vadd.f32 %v482, %v487
      %v492 = vadd.f32 %v483, %v487
      %v493 = vadd.f32 %v484, %v487
      %v494 = vadd.f32 %v485, %v487
      %v495 = vadd.f32 %v486, %v487
      %v496 = vstv %s169
      %v497 = vmul.f32 %v496, %v204
      %v498 = vmul.f32 %v496, %v205
      %v499 = vmul.f32 %v496, %v206
      %v500 = vmul.f32 %v496, %v207
      %v501 = vmul.f32 %v496, %v208
      %v502 = vmul.f32 %v496, %v209
      %v503 = vmul.f32 %v496, %v210
      %v504 = vmul.f32 %v496, %v211
      %v505 = vstv %s170
      %v506 = vmul.f32 %v505, %v213
      %v507 = vmul.f32 %v505, %v214
      %v508 = vmul.f32 %v505, %v215
      %v509 = vmul.f32 %v505, %v216
      %v510 = vmul.f32 %v505, %v217
      %v511 = vmul.f32 %v505, %v218
      %v512 = vmul.f32 %v505, %v219
      %v513 = vmul.f32 %v505, %v220
      %v514 = vadd.f32 %v497, %v506
      %v515 = vadd.f32 %v498, %v507
      %v516 = vadd.f32 %v499, %v508
      %v517 = vadd.f32 %v500, %v509
      %v518 = vadd.f32 %v501, %v510
      %v519 = vadd.f32 %v502, %v511
      %v520 = vadd.f32 %v503, %v512
      %v521 = vadd.f32 %v504, %v513
      %v522 = vstv %s188
      %v523 = vadd.f32 %v514, %v522
      %v524 = vadd.f32 %v515, %v522
      %v525 = vadd.f32 %v516, %v522
      %v526 = vadd.f32 %v517, %v522
      %v527 = vadd.f32 %v518, %v522
      %v528 = vadd.f32 %v519, %v522
      %v529 = vadd.f32 %v520, %v522
      %v530 = vadd.f32 %v521, %v522
      %v531 = vstv %s177
      %v532 = vmul.f32 %v531, %v213
      %v533 = vmul.f32 %v531, %v214
      %v534 = vmul.f32 %v531, %v215
      %v535 = vmul.f32 %v531, %v216
      %v536 = vmul.f32 %v531, %v217
      %v537 = vmul.f32 %v531, %v218
      %v538 = vmul.f32 %v531, %v219
      %v539 = vmul.f32 %v531, %v220
      %v540 = vstv %s178
      %v541 = vmul.f32 %v540, %v222
      %v542 = vmul.f32 %v540, %v223
      %v543 = vmul.f32 %v540, %v224
      %v544 = vmul.f32 %v540, %v225
      %v545 = vmul.f32 %v540, %v226
      %v546 = vmul.f32 %v540, %v227
      %v547 = vmul.f32 %v540, %v228
      %v548 = vmul.f32 %v540, %v229
      %v549 = vadd.f32 %v532, %v541
      %v550 = vadd.f32 %v533, %v542
      %v551 = vadd.f32 %v534, %v543
      %v552 = vadd.f32 %v535, %v544
      %v553 = vadd.f32 %v536, %v545
      %v554 = vadd.f32 %v537, %v546
      %v555 = vadd.f32 %v538, %v547
      %v556 = vadd.f32 %v539, %v548
      %v557 = vstv %s192
      %v558 = vadd.f32 %v549, %v557
      %v559 = vadd.f32 %v550, %v557
      %v560 = vadd.f32 %v551, %v557
      %v561 = vadd.f32 %v552, %v557
      %v562 = vadd.f32 %v553, %v557
      %v563 = vadd.f32 %v554, %v557
      %v564 = vadd.f32 %v555, %v557
      %v565 = vadd.f32 %v556, %v557
      %v566 = vmul.f32 %v523, %v558
      %v567 = vmul.f32 %v524, %v559
      %v568 = vmul.f32 %v525, %v560
      %v569 = vmul.f32 %v526, %v561
      %v570 = vmul.f32 %v527, %v562
      %v571 = vmul.f32 %v528, %v563
      %v572 = vmul.f32 %v529, %v564
      %v573 = vmul.f32 %v530, %v565
      %v574 = vxor.u32 %v566, 2147483648
      %v575 = vxor.u32 %v567, 2147483648
      %v576 = vxor.u32 %v568, 2147483648
      %v577 = vxor.u32 %v569, 2147483648
      %v578 = vxor.u32 %v570, 2147483648
      %v579 = vxor.u32 %v571, 2147483648
      %v580 = vxor.u32 %v572, 2147483648
      %v581 = vxor.u32 %v573, 2147483648
      %v582 = vmul.f32 %v574, 1.442695
      %v583 = vpow.pop %v582
      %v584 = vmul.f32 %v575, 1.442695
      %v585 = vpow.pop %v584
      %v586 = vmul.f32 %v576, 1.442695
      %v587 = vpow.pop %v586
      %v588 = vmul.f32 %v577, 1.442695
      %v589 = vpow.pop %v588
      %v590 = vmul.f32 %v578, 1.442695
      %v591 = vpow.pop %v590
      %v592 = vmul.f32 %v579, 1.442695
      %v593 = vpow.pop %v592
      %v594 = vmul.f32 %v580, 1.442695
      %v595 = vpow.pop %v594
      %v596 = vmul.f32 %v581, 1.442695
      %v597 = vpow.pop %v596
      %v598 = vadd.f32 %v583, 1.0
      %v599 = vadd.f32 %v585, 1.0
      %v600 = vadd.f32 %v587, 1.0
      %v601 = vadd.f32 %v589, 1.0
      %v602 = vadd.f32 %v591, 1.0
      %v603 = vadd.f32 %v593, 1.0
      %v604 = vadd.f32 %v595, 1.0
      %v605 = vadd.f32 %v597, 1.0
      %v606 = vrcp.pop %v598
      %v607 = vmul.f32 1.0, %v606
      %v608 = vrcp.pop %v599
      %v609 = vmul.f32 1.0, %v608
      %v610 = vrcp.pop %v600
      %v611 = vmul.f32 1.0, %v610
      %v612 = vrcp.pop %v601
      %v613 = vmul.f32 1.0, %v612
      %v614 = vrcp.pop %v602
      %v615 = vmul.f32 1.0, %v614
      %v616 = vrcp.pop %v603
      %v617 = vmul.f32 1.0, %v616
      %v618 = vrcp.pop %v604
      %v619 = vmul.f32 1.0, %v618
      %v620 = vrcp.pop %v605
      %v621 = vmul.f32 1.0, %v620
      %v622 = vmax.f32 %v488, 0.0
      %v623 = vmax.f32 %v489, 0.0
      %v624 = vmax.f32 %v490, 0.0
      %v625 = vmax.f32 %v491, 0.0
      %v626 = vmax.f32 %v492, 0.0
      %v627 = vmax.f32 %v493, 0.0
      %v628 = vmax.f32 %v494, 0.0
      %v629 = vmax.f32 %v495, 0.0
      %v630 = vmul.f32 %v622, %v607
      %v631 = vmul.f32 %v623, %v609
      %v632 = vmul.f32 %v624, %v611
      %v633 = vmul.f32 %v625, %v613
      %v634 = vmul.f32 %v626, %v615
      %v635 = vmul.f32 %v627, %v617
      %v636 = vmul.f32 %v628, %v619
      %v637 = vmul.f32 %v629, %v621
      %v638 = vlaneseq
      %v639 = vshrl.u32 %v638, 7
      %v640 = vsub.s32 0, %v639
      %v641 = vrot.slane %v152, %v640
      %v642 = vmul.f32 %v630, %v641
      %v643 = vmul.f32 %v631, %v641
      %v644 = vmul.f32 %v632, %v641
      %v645 = vmul.f32 %v633, %v641
      %v646 = vmul.f32 %v634, %v641
      %v647 = vmul.f32 %v635, %v641
      %v648 = vmul.f32 %v636, %v641
      %v649 = vmul.f32 %v637, %v641
      %v650 = vadd.f32 %v436, %v642
      %v651 = vadd.f32 %v437, %v643
      %v652 = vadd.f32 %v438, %v644
      %v653 = vadd.f32 %v439, %v645
      %v654 = vadd.f32 %v440, %v646
      %v655 = vadd.f32 %v441, %v647
      %v656 = vadd.f32 %v442, %v648
      %v657 = vadd.f32 %v443, %v649
      %v658 = vstv %s161
      %v659 = vmul.f32 %v658, %v204
      %v660 = vmul.f32 %v658, %v205
      %v661 = vmul.f32 %v658, %v206
      %v662 = vmul.f32 %v658, %v207
      %v663 = vmul.f32 %v658, %v208
      %v664 = vmul.f32 %v658, %v209
      %v665 = vmul.f32 %v658, %v210
      %v666 = vmul.f32 %v658, %v211
      %v667 = vstv %s162
      %v668 = vmul.f32 %v667, %v213
      %v669 = vmul.f32 %v667, %v214
      %v670 = vmul.f32 %v667, %v215
      %v671 = vmul.f32 %v667, %v216
      %v672 = vmul.f32 %v667, %v217
      %v673 = vmul.f32 %v667, %v218
      %v674 = vmul.f32 %v667, %v219
      %v675 = vmul.f32 %v667, %v220
      %v676 = vadd.f32 %v659, %v668
      %v677 = vadd.f32 %v660, %v669
      %v678 = vadd.f32 %v661, %v670
      %v679 = vadd.f32 %v662, %v671
      %v680 = vadd.f32 %v663, %v672
      %v681 = vadd.f32 %v664, %v673
      %v682 = vadd.f32 %v665, %v674
      %v683 = vadd.f32 %v666, %v675
      %v684 = vstv %s163
      %v685 = vmul.f32 %v684, %v222
      %v686 = vmul.f32 %v684, %v223
      %v687 = vmul.f32 %v684, %v224
      %v688 = vmul.f32 %v684, %v225
      %v689 = vmul.f32 %v684, %v226
      %v690 = vmul.f32 %v684, %v227
      %v691 = vmul.f32 %v684, %v228
      %v692 = vmul.f32 %v684, %v229
      %v693 = vadd.f32 %v676, %v685
      %v694 = vadd.f32 %v677, %v686
      %v695 = vadd.f32 %v678, %v687
      %v696 = vadd.f32 %v679, %v688
      %v697 = vadd.f32 %v680, %v689
      %v698 = vadd.f32 %v681, %v690
      %v699 = vadd.f32 %v682, %v691
      %v700 = vadd.f32 %v683, %v692
      %v701 = vstv %s185
      %v702 = vadd.f32 %v693, %v701
      %v703 = vadd.f32 %v694, %v701
      %v704 = vadd.f32 %v695, %v701
      %v705 = vadd.f32 %v696, %v701
      %v706 = vadd.f32 %v697, %v701
      %v707 = vadd.f32 %v698, %v701
      %v708 = vadd.f32 %v699, %v701
      %v709 = vadd.f32 %v700, %v701
      %v710 = vstv %s171
      %v711 = vmul.f32 %v710, %v204
      %v712 = vmul.f32 %v710, %v205
      %v713 = vmul.f32 %v710, %v206
      %v714 = vmul.f32 %v710, %v207
      %v715 = vmul.f32 %v710, %v208
      %v716 = vmul.f32 %v710, %v209
      %v717 = vmul.f32 %v710, %v210
      %v718 = vmul.f32 %v710, %v211
      %v719 = vstv %s172
      %v720 = vmul.f32 %v719, %v213
      %v721 = vmul.f32 %v719, %v214
      %v722 = vmul.f32 %v719, %v215
      %v723 = vmul.f32 %v719, %v216
      %v724 = vmul.f32 %v719, %v217
      %v725 = vmul.f32 %v719, %v218
      %v726 = vmul.f32 %v719, %v219
      %v727 = vmul.f32 %v719, %v220
      %v728 = vadd.f32 %v711, %v720
      %v729 = vadd.f32 %v712, %v721
      %v730 = vadd.f32 %v713, %v722
      %v731 = vadd.f32 %v714, %v723
      %v732 = vadd.f32 %v715, %v724
      %v733 = vadd.f32 %v716, %v725
      %v734 = vadd.f32 %v717, %v726
      %v735 = vadd.f32 %v718, %v727
      %v736 = vstv %s189
      %v737 = vadd.f32 %v728, %v736
      %v738 = vadd.f32 %v729, %v736
      %v739 = vadd.f32 %v730, %v736
      %v740 = vadd.f32 %v731, %v736
      %v741 = vadd.f32 %v732, %v736
      %v742 = vadd.f32 %v733, %v736
      %v743 = vadd.f32 %v734, %v736
      %v744 = vadd.f32 %v735, %v736
      %v745 = vstv %s179
      %v746 = vmul.f32 %v745, %v213
      %v747 = vmul.f32 %v745, %v214
      %v748 = vmul.f32 %v745, %v215
      %v749 = vmul.f32 %v745, %v216
      %v750 = vmul.f32 %v745, %v217
      %v751 = vmul.f32 %v745, %v218
      %v752 = vmul.f32 %v745, %v219
      %v753 = vmul.f32 %v745, %v220
      %v754 = vstv %s180
      %v755 = vmul.f32 %v754, %v222
      %v756 = vmul.f32 %v754, %v223
      %v757 = vmul.f32 %v754, %v224
      %v758 = vmul.f32 %v754, %v225
      %v759 = vmul.f32 %v754, %v226
      %v760 = vmul.f32 %v754, %v227
      %v761 = vmul.f32 %v754, %v228
      %v762 = vmul.f32 %v754, %v229
      %v763 = vadd.f32 %v746, %v755
      %v764 = vadd.f32 %v747, %v756
      %v765 = vadd.f32 %v748, %v757
      %v766 = vadd.f32 %v749, %v758
      %v767 = vadd.f32 %v750, %v759
      %v768 = vadd.f32 %v751, %v760
      %v769 = vadd.f32 %v752, %v761
      %v770 = vadd.f32 %v753, %v762
      %v771 = vstv %s193
      %v772 = vadd.f32 %v763, %v771
      %v773 = vadd.f32 %v764, %v771
      %v774 = vadd.f32 %v765, %v771
      %v775 = vadd.f32 %v766, %v771
      %v776 = vadd.f32 %v767, %v771
      %v777 = vadd.f32 %v768, %v771
      %v778 = vadd.f32 %v769, %v771
      %v779 = vadd.f32 %v770, %v771
      %v780 = vmul.f32 %v737, %v772
      %v781 = vmul.f32 %v738, %v773
      %v782 = vmul.f32 %v739, %v774
      %v783 = vmul.f32 %v740, %v775
      %v784 = vmul.f32 %v741, %v776
      %v785 = vmul.f32 %v742, %v777
      %v786 = vmul.f32 %v743, %v778
      %v787 = vmul.f32 %v744, %v779
      %v788 = vxor.u32 %v780, 2147483648
      %v789 = vxor.u32 %v781, 2147483648
      %v790 = vxor.u32 %v782, 2147483648
      %v791 = vxor.u32 %v783, 2147483648
      %v792 = vxor.u32 %v784, 2147483648
      %v793 = vxor.u32 %v785, 2147483648
      %v794 = vxor.u32 %v786, 2147483648
      %v795 = vxor.u32 %v787, 2147483648
      %v796 = vmul.f32 %v788, 1.442695
      %v797 = vpow.pop %v796
      %v798 = vmul.f32 %v789, 1.442695
      %v799 = vpow.pop %v798
      %v800 = vmul.f32 %v790, 1.442695
      %v801 = vpow.pop %v800
      %v802 = vmul.f32 %v791, 1.442695
      %v803 = vpow.pop %v802
      %v804 = vmul.f32 %v792, 1.442695
      %v805 = vpow.pop %v804
      %v806 = vmul.f32 %v793, 1.442695
      %v807 = vpow.pop %v806
      %v808 = vmul.f32 %v794, 1.442695
      %v809 = vpow.pop %v808
      %v810 = vmul.f32 %v795, 1.442695
      %v811 = vpow.pop %v810
      %v812 = vadd.f32 %v797, 1.0
      %v813 = vadd.f32 %v799, 1.0
      %v814 = vadd.f32 %v801, 1.0
      %v815 = vadd.f32 %v803, 1.0
      %v816 = vadd.f32 %v805, 1.0
      %v817 = vadd.f32 %v807, 1.0
      %v818 = vadd.f32 %v809, 1.0
      %v819 = vadd.f32 %v811, 1.0
      %v820 = vrcp.pop %v812
      %v821 = vmul.f32 1.0, %v820
      %v822 = vrcp.pop %v813
      %v823 = vmul.f32 1.0, %v822
      %v824 = vrcp.pop %v814
      %v825 = vmul.f32 1.0, %v824
      %v826 = vrcp.pop %v815
      %v827 = vmul.f32 1.0, %v826
      %v828 = vrcp.pop %v816
      %v829 = vmul.f32 1.0, %v828
      %v830 = vrcp.pop %v817
      %v831 = vmul.f32 1.0, %v830
      %v832 = vrcp.pop %v818
      %v833 = vmul.f32 1.0, %v832
      %v834 = vrcp.pop %v819
      %v835 = vmul.f32 1.0, %v834
      %v836 = vmax.f32 %v702, 0.0
      %v837 = vmax.f32 %v703, 0.0
      %v838 = vmax.f32 %v704, 0.0
      %v839 = vmax.f32 %v705, 0.0
      %v840 = vmax.f32 %v706, 0.0
      %v841 = vmax.f32 %v707, 0.0
      %v842 = vmax.f32 %v708, 0.0
      %v843 = vmax.f32 %v709, 0.0
      %v844 = vmul.f32 %v836, %v821
      %v845 = vmul.f32 %v837, %v823
      %v846 = vmul.f32 %v838, %v825
      %v847 = vmul.f32 %v839, %v827
      %v848 = vmul.f32 %v840, %v829
      %v849 = vmul.f32 %v841, %v831
      %v850 = vmul.f32 %v842, %v833
      %v851 = vmul.f32 %v843, %v835
      %v852 = vlaneseq
      %v853 = vshrl.u32 %v852, 7
      %v854 = vsub.s32 0, %v853
      %v855 = vrot.slane %v153, %v854
      %v856 = vmul.f32 %v844, %v855
      %v857 = vmul.f32 %v845, %v855
      %v858 = vmul.f32 %v846, %v855
      %v859 = vmul.f32 %v847, %v855
      %v860 = vmul.f32 %v848, %v855
      %v861 = vmul.f32 %v849, %v855
      %v862 = vmul.f32 %v850, %v855
      %v863 = vmul.f32 %v851, %v855
      %v864 = vadd.f32 %v650, %v856
      %v865 = vadd.f32 %v651, %v857
      %v866 = vadd.f32 %v652, %v858
      %v867 = vadd.f32 %v653, %v859
      %v868 = vadd.f32 %v654, %v860
      %v869 = vadd.f32 %v655, %v861
      %v870 = vadd.f32 %v656, %v862
      %v871 = vadd.f32 %v657, %v863
      %v872 = vstv %s164
      %v873 = vmul.f32 %v872, %v204
      %v874 = vmul.f32 %v872, %v205
      %v875 = vmul.f32 %v872, %v206
      %v876 = vmul.f32 %v872, %v207
      %v877 = vmul.f32 %v872, %v208
      %v878 = vmul.f32 %v872, %v209
      %v879 = vmul.f32 %v872, %v210
      %v880 = vmul.f32 %v872, %v211
      %v881 = vstv %s165
      %v882 = vmul.f32 %v881, %v213
      %v883 = vmul.f32 %v881, %v214
      %v884 = vmul.f32 %v881, %v215
      %v885 = vmul.f32 %v881, %v216
      %v886 = vmul.f32 %v881, %v217
      %v887 = vmul.f32 %v881, %v218
      %v888 = vmul.f32 %v881, %v219
      %v889 = vmul.f32 %v881, %v220
      %v890 = vadd.f32 %v873, %v882
      %v891 = vadd.f32 %v874, %v883
      %v892 = vadd.f32 %v875, %v884
      %v893 = vadd.f32 %v876, %v885
      %v894 = vadd.f32 %v877, %v886
      %v895 = vadd.f32 %v878, %v887
      %v896 = vadd.f32 %v879, %v888
      %v897 = vadd.f32 %v880, %v889
      %v898 = vstv %s166
      %v899 = vmul.f32 %v898, %v222
      %v900 = vmul.f32 %v898, %v223
      %v901 = vmul.f32 %v898, %v224
      %v902 = vmul.f32 %v898, %v225
      %v903 = vmul.f32 %v898, %v226
      %v904 = vmul.f32 %v898, %v227
      %v905 = vmul.f32 %v898, %v228
      %v906 = vmul.f32 %v898, %v229
      %v907 = vadd.f32 %v890, %v899
      %v908 = vadd.f32 %v891, %v900
      %v909 = vadd.f32 %v892, %v901
      %v910 = vadd.f32 %v893, %v902
      %v911 = vadd.f32 %v894, %v903
      %v912 = vadd.f32 %v895, %v904
      %v913 = vadd.f32 %v896, %v905
      %v914 = vadd.f32 %v897, %v906
      %v915 = vstv %s186
      %v916 = vadd.f32 %v907, %v915
      %v917 = vadd.f32 %v908, %v915
      %v918 = vadd.f32 %v909, %v915
      %v919 = vadd.f32 %v910, %v915
      %v920 = vadd.f32 %v911, %v915
      %v921 = vadd.f32 %v912, %v915
      %v922 = vadd.f32 %v913, %v915
      %v923 = vadd.f32 %v914, %v915
      %v924 = vstv %s173
      %v925 = vmul.f32 %v924, %v204
      %v926 = vmul.f32 %v924, %v205
      %v927 = vmul.f32 %v924, %v206
      %v928 = vmul.f32 %v924, %v207
      %v929 = vmul.f32 %v924, %v208
      %v930 = vmul.f32 %v924, %v209
      %v931 = vmul.f32 %v924, %v210
      %v932 = vmul.f32 %v924, %v211
      %v933 = vstv %s174
      %v934 = vmul.f32 %v933, %v213
      %v935 = vmul.f32 %v933, %v214
      %v936 = vmul.f32 %v933, %v215
      %v937 = vmul.f32 %v933, %v216
      %v938 = vmul.f32 %v933, %v217
      %v939 = vmul.f32 %v933, %v218
      %v940 = vmul.f32 %v933, %v219
      %v941 = vmul.f32 %v933, %v220
      %v942 = vadd.f32 %v925, %v934
      %v943 = vadd.f32 %v926, %v935
      %v944 = vadd.f32 %v927, %v936
      %v945 = vadd.f32 %v928, %v937
      %v946 = vadd.f32 %v929, %v938
      %v947 = vadd.f32 %v930, %v939
      %v948 = vadd.f32 %v931, %v940
      %v949 = vadd.f32 %v932, %v941
      %v950 = vstv %s190
      %v951 = vadd.f32 %v942, %v950
      %v952 = vadd.f32 %v943, %v950
      %v953 = vadd.f32 %v944, %v950
      %v954 = vadd.f32 %v945, %v950
      %v955 = vadd.f32 %v946, %v950
      %v956 = vadd.f32 %v947, %v950
      %v957 = vadd.f32 %v948, %v950
      %v958 = vadd.f32 %v949, %v950
      %v959 = vstv %s181
      %v960 = vmul.f32 %v959, %v213
      %v961 = vmul.f32 %v959, %v214
      %v962 = vmul.f32 %v959, %v215
      %v963 = vmul.f32 %v959, %v216
      %v964 = vmul.f32 %v959, %v217
      %v965 = vmul.f32 %v959, %v218
      %v966 = vmul.f32 %v959, %v219
      %v967 = vmul.f32 %v959, %v220
      %v968 = vstv %s182
      %v969 = vmul.f32 %v968, %v222
      %v970 = vmul.f32 %v968, %v223
      %v971 = vmul.f32 %v968, %v224
      %v972 = vmul.f32 %v968, %v225
      %v973 = vmul.f32 %v968, %v226
      %v974 = vmul.f32 %v968, %v227
      %v975 = vmul.f32 %v968, %v228
      %v976 = vmul.f32 %v968, %v229
      %v977 = vadd.f32 %v960, %v969
      %v978 = vadd.f32 %v961, %v970
      %v979 = vadd.f32 %v962, %v971
      %v980 = vadd.f32 %v963, %v972
      %v981 = vadd.f32 %v964, %v973
      %v982 = vadd.f32 %v965, %v974
      %v983 = vadd.f32 %v966, %v975
      %v984 = vadd.f32 %v967, %v976
      %v985 = vstv %s194
      %v986 = vadd.f32 %v977, %v985
      %v987 = vadd.f32 %v978, %v985
      %v988 = vadd.f32 %v979, %v985
      %v989 = vadd.f32 %v980, %v985
      %v990 = vadd.f32 %v981, %v985
      %v991 = vadd.f32 %v982, %v985
      %v992 = vadd.f32 %v983, %v985
      %v993 = vadd.f32 %v984, %v985
      %v994 = vmul.f32 %v951, %v986
      %v995 = vmul.f32 %v952, %v987
      %v996 = vmul.f32 %v953, %v988
      %v997 = vmul.f32 %v954, %v989
      %v998 = vmul.f32 %v955, %v990
      %v999 = vmul.f32 %v956, %v991
      %v1000 = vmul.f32 %v957, %v992
      %v1001 = vmul.f32 %v958, %v993
      %v1002 = vxor.u32 %v994, 2147483648
      %v1003 = vxor.u32 %v995, 2147483648
      %v1004 = vxor.u32 %v996, 2147483648
      %v1005 = vxor.u32 %v997, 2147483648
      %v1006 = vxor.u32 %v998, 2147483648
      %v1007 = vxor.u32 %v999, 2147483648
      %v1008 = vxor.u32 %v1000, 2147483648
      %v1009 = vxor.u32 %v1001, 2147483648
      %v1010 = vmul.f32 %v1002, 1.442695
      %v1011 = vpow.pop %v1010
      %v1012 = vmul.f32 %v1003, 1.442695
      %v1013 = vpow.pop %v1012
      %v1014 = vmul.f32 %v1004, 1.442695
      %v1015 = vpow.pop %v1014
      %v1016 = vmul.f32 %v1005, 1.442695
      %v1017 = vpow.pop %v1016
      %v1018 = vmul.f32 %v1006, 1.442695
      %v1019 = vpow.pop %v1018
      %v1020 = vmul.f32 %v1007, 1.442695
      %v1021 = vpow.pop %v1020
      %v1022 = vmul.f32 %v1008, 1.442695
      %v1023 = vpow.pop %v1022
      %v1024 = vmul.f32 %v1009, 1.442695
      %v1025 = vpow.pop %v1024
      %v1026 = vadd.f32 %v1011, 1.0
      %v1027 = vadd.f32 %v1013, 1.0
      %v1028 = vadd.f32 %v1015, 1.0
      %v1029 = vadd.f32 %v1017, 1.0
      %v1030 = vadd.f32 %v1019, 1.0
      %v1031 = vadd.f32 %v1021, 1.0
      %v1032 = vadd.f32 %v1023, 1.0
      %v1033 = vadd.f32 %v1025, 1.0
      %v1034 = vrcp.pop %v1026
      %v1035 = vmul.f32 1.0, %v1034
      %v1036 = vrcp.pop %v1027
      %v1037 = vmul.f32 1.0, %v1036
      %v1038 = vrcp.pop %v1028
      %v1039 = vmul.f32 1.0, %v1038
      %v1040 = vrcp.pop %v1029
      %v1041 = vmul.f32 1.0, %v1040
      %v1042 = vrcp.pop %v1030
      %v1043 = vmul.f32 1.0, %v1042
      %v1044 = vrcp.pop %v1031
      %v1045 = vmul.f32 1.0, %v1044
      %v1046 = vrcp.pop %v1032
      %v1047 = vmul.f32 1.0, %v1046
      %v1048 = vrcp.pop %v1033
      %v1049 = vmul.f32 1.0, %v1048
      %v1050 = vmax.f32 %v916, 0.0
      %v1051 = vmax.f32 %v917, 0.0
      %v1052 = vmax.f32 %v918, 0.0
      %v1053 = vmax.f32 %v919, 0.0
      %v1054 = vmax.f32 %v920, 0.0
      %v1055 = vmax.f32 %v921, 0.0
      %v1056 = vmax.f32 %v922, 0.0
      %v1057 = vmax.f32 %v923, 0.0
      %v1058 = vmul.f32 %v1050, %v1035
      %v1059 = vmul.f32 %v1051, %v1037
      %v1060 = vmul.f32 %v1052, %v1039
      %v1061 = vmul.f32 %v1053, %v1041
      %v1062 = vmul.f32 %v1054, %v1043
      %v1063 = vmul.f32 %v1055, %v1045
      %v1064 = vmul.f32 %v1056, %v1047
      %v1065 = vmul.f32 %v1057, %v1049
      %v1066 = vlaneseq
      %v1067 = vshrl.u32 %v1066, 7
      %v1068 = vsub.s32 0, %v1067
      %v1069 = vrot.slane %v154, %v1068
      %v1070 = vmul.f32 %v1058, %v1069
      %v1071 = vmul.f32 %v1059, %v1069
      %v1072 = vmul.f32 %v1060, %v1069
      %v1073 = vmul.f32 %v1061, %v1069
      %v1074 = vmul.f32 %v1062, %v1069
      %v1075 = vmul.f32 %v1063, %v1069
      %v1076 = vmul.f32 %v1064, %v1069
      %v1077 = vmul.f32 %v1065, %v1069
      %v1078 = vadd.f32 %v864, %v1070
      %v1079 = vadd.f32 %v865, %v1071
      %v1080 = vadd.f32 %v866, %v1072
      %v1081 = vadd.f32 %v867, %v1073
      %v1082 = vadd.f32 %v868, %v1074
      %v1083 = vadd.f32 %v869, %v1075
      %v1084 = vadd.f32 %v870, %v1076
      %v1085 = vadd.f32 %v871, %v1077
      %1086 = vadd.xlane.f32.xlu0 %v1078
      %v1087 = vpop.xlane.xlu0 %1086
      %1088 = vadd.xlane.f32.xlu0 %v1079
      %v1089 = vpop.xlane.xlu0 %1088
      %1090 = vadd.xlane.f32.xlu0 %v1080
      %v1091 = vpop.xlane.xlu0 %1090
      %1092 = vadd.xlane.f32.xlu0 %v1081
      %v1093 = vpop.xlane.xlu0 %1092
      %1094 = vadd.xlane.f32.xlu0 %v1082
      %v1095 = vpop.xlane.xlu0 %1094
      %1096 = vadd.xlane.f32.xlu0 %v1083
      %v1097 = vpop.xlane.xlu0 %1096
      %1098 = vadd.xlane.f32.xlu0 %v1084
      %v1099 = vpop.xlane.xlu0 %1098
      %1100 = vadd.xlane.f32.xlu0 %v1085
      %v1101 = vpop.xlane.xlu0 %1100
      %v1102 = vstv %s195
      %v1103 = vadd.f32 %v1087, %v1102
      %v1104 = vadd.f32 %v1089, %v1102
      %v1105 = vadd.f32 %v1091, %v1102
      %v1106 = vadd.f32 %v1093, %v1102
      %v1107 = vadd.f32 %v1095, %v1102
      %v1108 = vadd.f32 %v1097, %v1102
      %v1109 = vadd.f32 %v1099, %v1102
      %v1110 = vadd.f32 %v1101, %v1102
      %s1111 = scalar_lea.vmem [#allocation18], %s202
      %vm1112 = vcmask 7168
      %1113 = vst.msk [vmem:[%s1111] sm:$0xff] %vm1112, %v1103
      %1114 = vst.msk [vmem:[%s1111 + $0x8] sm:$0xff] %vm1112, %v1104
      %1115 = vst.msk [vmem:[%s1111 + $0x10] sm:$0xff] %vm1112, %v1105
      %1116 = vst.msk [vmem:[%s1111 + $0x18] sm:$0xff] %vm1112, %v1106
      %1117 = vst.msk [vmem:[%s1111 + $0x20] sm:$0xff] %vm1112, %v1107
      %1118 = vst.msk [vmem:[%s1111 + $0x28] sm:$0xff] %vm1112, %v1108
      %1119 = vst.msk [vmem:[%s1111 + $0x30] sm:$0xff] %vm1112, %v1109
      %1120 = vst.msk [vmem:[%s1111 + $0x38] sm:$0xff] %vm1112, %v1110
    $region86: #{tpu_custom_call.1} parent=1 // loop_footer
      %s201 = sadd.s32 1, %s197
    $region87: #{tpu_custom_call.1} parent=1 // loop_footer_branch
      %196 = sbr.rel target = $region83
    $region88: #{tpu_custom_call.1} parent=1 // loop_exit
      _
    // Predicated region
    $region89: #{tpu_custom_call.1} parent=1 // pred_check
      _
    $region90: #{tpu_custom_call.1} parent=1 // pred_check_branch
      %1122 = sbr.rel (0) target = $region92
    $region91: #{tpu_custom_call.1} parent=1 // pred_region
      // Predicated region
      $region93: #{tpu_custom_call.1} parent=91 // pred_check
        _
      $region94: #{tpu_custom_call.1} parent=91 // pred_check_branch
        %1124 = sbr.rel (0) target = $region96
      $region95: #{tpu_custom_call.1} parent=91 // pred_region
        // Predicated region
        $region97: #{tpu_custom_call.1} parent=95 // pred_check
          _
        $region98: #{tpu_custom_call.1} parent=95 // pred_check_branch
          %1126 = sbr.rel (0) target = $region100
        $region99: #{tpu_custom_call.1} parent=95 // pred_region
          // Predicated region
          $region112: #{tpu_custom_call.1} parent=99 // pred_check
            _
          $region113: #{tpu_custom_call.1} parent=99 // pred_check_branch
            %1165 = sbr.rel (0) target = $region115
          $region114: #{tpu_custom_call.1} parent=99 // pred_region
            loop: start=0, step=1, limit=1
            $region116: #{tpu_custom_call.1} parent=114 // loop_pre_header
              _
            $region117: #{tpu_custom_call.1} parent=114 // loop_header
              %s1167 = sphi 0, %s1171
              %p1168 = scmp.ge.s32.totalorder %s1167, 1
              %s1172 = sphi [#allocation18], [#allocation18]
              %s1173 = sphi %s11, %s11
            $region118: #{tpu_custom_call.1} parent=114 // loop_header_branch
              %1170 = sbr.rel (%p1168) target = $region122
            $region119: #{tpu_custom_call.1} parent=114 // loop_body
              %v1174 = vld [vmem:[%s1172] sm:$0xff]
              %1175 = vst [vmem:[%s1173] sm:$0xff] %v1174
              %v1176 = vld [vmem:[%s1172 + $0x8] sm:$0xff]
              %1177 = vst [vmem:[%s1173 + $0x8] sm:$0xff] %v1176
              %v1178 = vld [vmem:[%s1172 + $0x10] sm:$0xff]
              %1179 = vst [vmem:[%s1173 + $0x10] sm:$0xff] %v1178
              %v1180 = vld [vmem:[%s1172 + $0x18] sm:$0xff]
              %1181 = vst [vmem:[%s1173 + $0x18] sm:$0xff] %v1180
              %v1182 = vld [vmem:[%s1172 + $0x20] sm:$0xff]
              %1183 = vst [vmem:[%s1173 + $0x20] sm:$0xff] %v1182
              %v1184 = vld [vmem:[%s1172 + $0x28] sm:$0xff]
              %1185 = vst [vmem:[%s1173 + $0x28] sm:$0xff] %v1184
              %v1186 = vld [vmem:[%s1172 + $0x30] sm:$0xff]
              %1187 = vst [vmem:[%s1173 + $0x30] sm:$0xff] %v1186
              %v1188 = vld [vmem:[%s1172 + $0x38] sm:$0xff]
              %1189 = vst [vmem:[%s1173 + $0x38] sm:$0xff] %v1188
              %v1190 = vld [vmem:[%s1172 + $0x40] sm:$0xff]
              %1191 = vst [vmem:[%s1173 + $0x40] sm:$0xff] %v1190
              %v1192 = vld [vmem:[%s1172 + $0x48] sm:$0xff]
              %1193 = vst [vmem:[%s1173 + $0x48] sm:$0xff] %v1192
              %v1194 = vld [vmem:[%s1172 + $0x50] sm:$0xff]
              %1195 = vst [vmem:[%s1173 + $0x50] sm:$0xff] %v1194
              %v1196 = vld [vmem:[%s1172 + $0x58] sm:$0xff]
              %1197 = vst [vmem:[%s1173 + $0x58] sm:$0xff] %v1196
              %v1198 = vld [vmem:[%s1172 + $0x60] sm:$0xff]
              %1199 = vst [vmem:[%s1173 + $0x60] sm:$0xff] %v1198
            $region120: #{tpu_custom_call.1} parent=114 // loop_footer
              %s1171 = sadd.s32 1, %s1167
            $region121: #{tpu_custom_call.1} parent=114 // loop_footer_branch
              %1166 = sbr.rel target = $region117
            $region122: #{tpu_custom_call.1} parent=114 // loop_exit
              _
          $region115: #{tpu_custom_call.1} parent=99 // pred_fallthru
            _
          // Predicated region
          $region123: #{tpu_custom_call.1} parent=99 // pred_check
            _
          $region124: #{tpu_custom_call.1} parent=99 // pred_check_branch
            %1201 = sbr.rel target = $region126
          $region125: #{tpu_custom_call.1} parent=99 // pred_region
            _
          $region126: #{tpu_custom_call.1} parent=99 // pred_fallthru
            _
        $region100: #{tpu_custom_call.1} parent=95 // pred_fallthru
          _
        // Predicated region
        $region101: #{tpu_custom_call.1} parent=95 // pred_check
          _
        $region102: #{tpu_custom_call.1} parent=95 // pred_check_branch
          %1128 = sbr.rel target = $region104
        $region103: #{tpu_custom_call.1} parent=95 // pred_region
          loop: start=0, step=1, limit=1
          $region105: #{tpu_custom_call.1} parent=103 // loop_pre_header
            _
          $region106: #{tpu_custom_call.1} parent=103 // loop_header
            %s1131 = sphi 0, %s1135
            %p1132 = scmp.ge.s32.totalorder %s1131, 1
            %s1136 = sphi [#allocation18], [#allocation18]
            %s1137 = sphi %s11, %s11
          $region107: #{tpu_custom_call.1} parent=103 // loop_header_branch
            %1134 = sbr.rel (%p1132) target = $region111
          $region108: #{tpu_custom_call.1} parent=103 // loop_body
            %v1138 = vld [vmem:[%s1136] sm:$0xff]
            %1139 = vst [vmem:[%s1137] sm:$0xff] %v1138
            %v1140 = vld [vmem:[%s1136 + $0x8] sm:$0xff]
            %1141 = vst [vmem:[%s1137 + $0x8] sm:$0xff] %v1140
            %v1142 = vld [vmem:[%s1136 + $0x10] sm:$0xff]
            %1143 = vst [vmem:[%s1137 + $0x10] sm:$0xff] %v1142
            %v1144 = vld [vmem:[%s1136 + $0x18] sm:$0xff]
            %1145 = vst [vmem:[%s1137 + $0x18] sm:$0xff] %v1144
            %v1146 = vld [vmem:[%s1136 + $0x20] sm:$0xff]
            %1147 = vst [vmem:[%s1137 + $0x20] sm:$0xff] %v1146
            %v1148 = vld [vmem:[%s1136 + $0x28] sm:$0xff]
            %1149 = vst [vmem:[%s1137 + $0x28] sm:$0xff] %v1148
            %v1150 = vld [vmem:[%s1136 + $0x30] sm:$0xff]
            %1151 = vst [vmem:[%s1137 + $0x30] sm:$0xff] %v1150
            %v1152 = vld [vmem:[%s1136 + $0x38] sm:$0xff]
            %1153 = vst [vmem:[%s1137 + $0x38] sm:$0xff] %v1152
            %v1154 = vld [vmem:[%s1136 + $0x40] sm:$0xff]
            %1155 = vst [vmem:[%s1137 + $0x40] sm:$0xff] %v1154
            %v1156 = vld [vmem:[%s1136 + $0x48] sm:$0xff]
            %1157 = vst [vmem:[%s1137 + $0x48] sm:$0xff] %v1156
            %v1158 = vld [vmem:[%s1136 + $0x50] sm:$0xff]
            %1159 = vst [vmem:[%s1137 + $0x50] sm:$0xff] %v1158
            %v1160 = vld [vmem:[%s1136 + $0x58] sm:$0xff]
            %1161 = vst [vmem:[%s1137 + $0x58] sm:$0xff] %v1160
            %v1162 = vld [vmem:[%s1136 + $0x60] sm:$0xff]
            %1163 = vst [vmem:[%s1137 + $0x60] sm:$0xff] %v1162
          $region109: #{tpu_custom_call.1} parent=103 // loop_footer
            %s1135 = sadd.s32 1, %s1131
          $region110: #{tpu_custom_call.1} parent=103 // loop_footer_branch
            %1130 = sbr.rel target = $region106
          $region111: #{tpu_custom_call.1} parent=103 // loop_exit
            _
        $region104: #{tpu_custom_call.1} parent=95 // pred_fallthru
          _
      $region96: #{tpu_custom_call.1} parent=91 // pred_fallthru
        _
      %1202 = vnop
    $region92: #{tpu_custom_call.1} parent=1 // pred_fallthru
      _
    // Predicated region
    $region127: #{tpu_custom_call.1} parent=1 // pred_check
      _
    $region128: #{tpu_custom_call.1} parent=1 // pred_check_branch
      %1204 = sbr.rel (0) target = $region130
    $region129: #{tpu_custom_call.1} parent=1 // pred_region
      _
    $region130: #{tpu_custom_call.1} parent=1 // pred_fallthru
      _
    %1205 = vsyncpa [#allocation4], 1
    %1206 = vsyncpa [#allocation7], 1
    %1207 = vsyncpa [#allocation5], 1
    %1208 = vsyncpa [#allocation11], 1
    %1209 = vsyncpa [#allocation14], 1
    %1210 = vsyncpa [#allocation17], 1

</llo_original>
